<compile_context>
chip_gen: v5e
topology: v5e:2x2
jax: 0.10.0
libtpu: 0.0.40
codegen_flags: <defaults>
</compile_context>

<pallas_src>
import math
import functools

import jax
import jax.numpy as jnp
from jax import lax
from jax.experimental import pallas as pl
from jax.experimental.pallas import tpu as pltpu

_VMEM_LIMIT = 32 * 1024 * 1024  # explicit scoped-VMEM budget (safe on v5e/v6e/v7x)


# ----------------------------------------------------------------------------
# Stage 1: fused QKV projection (x @ Wqkv + b), 1/sqrt(d_k) folded into Q.
# ----------------------------------------------------------------------------
def _qkv_proj_kernel(x_ref, w_ref, b_ref, q_ref, k_ref, v_ref, *, scale):
    # x_ref: (1, bs, D) f32 | w_ref: (D, 3D) bf16 | b_ref: (1, 3D) f32
    # q/k/v_ref: (1, bs, D) bf16
    D = q_ref.shape[-1]
    x = x_ref[0].astype(jnp.bfloat16)                       # bf16 MXU operand
    y = jnp.dot(x, w_ref[...], preferred_element_type=jnp.float32) + b_ref[0]
    q_ref[0] = (y[:, 0 * D:1 * D] * scale).astype(q_ref.dtype)   # fold attn scale
    k_ref[0] = y[:, 1 * D:2 * D].astype(k_ref.dtype)
    v_ref[0] = y[:, 2 * D:3 * D].astype(v_ref.dtype)


def _qkv_proj(x, wqkv_bf16, bqkv, *, block_s, scale):
    B, S, D = x.shape
    grid = (B, S // block_s)
    x_spec = pl.BlockSpec((1, block_s, D), lambda b, s: (b, s, 0))
    w_spec = pl.BlockSpec((D, 3 * D), lambda b, s: (0, 0))    # constant block index
    b_spec = pl.BlockSpec((1, 3 * D), lambda b, s: (0, 0))
    o_spec = pl.BlockSpec((1, block_s, D), lambda b, s: (b, s, 0))
    o_sds = jax.ShapeDtypeStruct((B, S, D), jnp.bfloat16)
    return pl.pallas_call(
        functools.partial(_qkv_proj_kernel, scale=scale),
        out_shape=(o_sds, o_sds, o_sds),
        grid_spec=pltpu.PrefetchScalarGridSpec(
            num_scalar_prefetch=0, grid=grid,
            in_specs=[x_spec, w_spec, b_spec],
            out_specs=(o_spec, o_spec, o_spec)),
        compiler_params=pltpu.CompilerParams(
            dimension_semantics=("parallel", "parallel"),
            vmem_limit_bytes=_VMEM_LIMIT),
    )(x, wqkv_bf16, bqkv.reshape(1, 3 * D))


# ----------------------------------------------------------------------------
# Stage 2: causal flash attention with online softmax.
# ----------------------------------------------------------------------------
def _flash_attn_kernel(q_ref, k_ref, v_ref, o_ref, m_sc, l_sc, acc_sc,
                       *, block_q, block_kv):
    # q_ref: (1,1,tq,dk) bf16 | k/v_ref: (1,1,tk,dk) bf16 | o_ref: (1,1,tq,dk) bf16
    # scratch: m_sc (tq,1) f32, l_sc (tq,1) f32, acc_sc (tq,dk) f32
    i = pl.program_id(2)          # query block
    j = pl.program_id(3)          # kv block (innermost, "arbitrary")

    @pl.when(j == 0)
    def _init():
        m_sc[...] = jnp.full_like(m_sc, -jnp.inf)
        l_sc[...] = jnp.zeros_like(l_sc)
        acc_sc[...] = jnp.zeros_like(acc_sc)

    @pl.when(j <= i)              # skip blocks entirely above the causal diagonal
    def _compute():
        q = q_ref[0, 0]           # (tq, dk) bf16 (already pre-scaled by 1/sqrt(dk))
        k = k_ref[0, 0]           # (tk, dk) bf16
        v = v_ref[0, 0]           # (tk, dk) bf16

        # Q @ K^T via dot_general contracting last dims — no explicit transpose.
        s = lax.dot_general(q, k, (((1,), (1,)), ((), ())),
                            preferred_element_type=jnp.float32)    # (tq, tk) f32

        # Causal mask (global indices). Only diagonal blocks are actually masked;
        # for fully-below blocks the predicate is all-True (select cost is noise).
        row = i * block_q + lax.broadcasted_iota(jnp.int32, (block_q, block_kv), 0)
        col = j * block_kv + lax.broadcasted_iota(jnp.int32, (block_q, block_kv), 1)
        s = jnp.where(col <= row, s, -1e30)    # finite big-neg: no inf-inf NaN risk

        m_prev = m_sc[...]
        m_new = jnp.maximum(m_prev, jnp.max(s, axis=-1, keepdims=True))
        alpha = jnp.exp(m_prev - m_new)
        p = jnp.exp(s - m_new)                                   # f32 softmax stats
        l_sc[...] = alpha * l_sc[...] + jnp.sum(p, axis=-1, keepdims=True)
        acc_sc[...] = alpha * acc_sc[...] + jnp.dot(
            p.astype(v.dtype), v, preferred_element_type=jnp.float32)
        m_sc[...] = m_new

    @pl.when(j == i)              # last contributing kv block for this q block
    def _finalize():
        inv_l = pl.reciprocal(l_sc[...], approx=True)            # EUP, not VALU
        o_ref[0, 0] = (acc_sc[...] * inv_l).astype(o_ref.dtype)


def _flash_attention(q, k, v, *, block_q, block_kv):
    B, H, S, dk = q.shape
    grid = (B, H, S // block_q, S // block_kv)
    q_spec = pl.BlockSpec((1, 1, block_q, dk), lambda b, h, i, j: (b, h, i, 0))
    # Map skipped (above-diagonal) kv blocks back onto block i so their DMA is
    # elided (block index unchanged between consecutive grid steps).
    kv_spec = pl.BlockSpec((1, 1, block_kv, dk),
                           lambda b, h, i, j: (b, h, jnp.minimum(i, j), 0))
    o_spec = pl.BlockSpec((1, 1, block_q, dk), lambda b, h, i, j: (b, h, i, 0))
    return pl.pallas_call(
        functools.partial(_flash_attn_kernel, block_q=block_q, block_kv=block_kv),
        out_shape=jax.ShapeDtypeStruct((B, H, S, dk), jnp.bfloat16),
        grid_spec=pltpu.PrefetchScalarGridSpec(
            num_scalar_prefetch=0, grid=grid,
            in_specs=[q_spec, kv_spec, kv_spec],
            out_specs=o_spec,
            scratch_shapes=[pltpu.VMEM((block_q, 1), jnp.float32),
                            pltpu.VMEM((block_q, 1), jnp.float32),
                            pltpu.VMEM((block_q, dk), jnp.float32)]),
        compiler_params=pltpu.CompilerParams(
            dimension_semantics=("parallel", "parallel", "parallel", "arbitrary"),
            vmem_limit_bytes=_VMEM_LIMIT),
    )(q, k, v)


# ----------------------------------------------------------------------------
# Stage 3: output projection (attn @ Wproj + b).
# ----------------------------------------------------------------------------
def _out_proj_kernel(a_ref, w_ref, b_ref, o_ref):
    a = a_ref[0]                                                # (bs, D) bf16
    y = jnp.dot(a, w_ref[...], preferred_element_type=jnp.float32) + b_ref[0]
    o_ref[0] = y.astype(o_ref.dtype)


def _out_proj(a, wproj_bf16, bproj, *, block_s, out_dtype):
    B, S, D = a.shape
    grid = (B, S // block_s)
    a_spec = pl.BlockSpec((1, block_s, D), lambda b, s: (b, s, 0))
    w_spec = pl.BlockSpec((D, D), lambda b, s: (0, 0))
    b_spec = pl.BlockSpec((1, D), lambda b, s: (0, 0))
    o_spec = pl.BlockSpec((1, block_s, D), lambda b, s: (b, s, 0))
    return pl.pallas_call(
        _out_proj_kernel,
        out_shape=jax.ShapeDtypeStruct((B, S, D), out_dtype),
        grid_spec=pltpu.PrefetchScalarGridSpec(
            num_scalar_prefetch=0, grid=grid,
            in_specs=[a_spec, w_spec, b_spec],
            out_specs=o_spec),
        compiler_params=pltpu.CompilerParams(
            dimension_semantics=("parallel", "parallel"),
            vmem_limit_bytes=_VMEM_LIMIT),
    )(a, wproj_bf16, bproj.reshape(1, D))


# ----------------------------------------------------------------------------
# Top-level wrapper (forward pass of CausalMultiHeadAttention, eval mode).
# Weights are stored (in, out): kernel computes x @ W + b.
# ----------------------------------------------------------------------------
def causal_mha(x, wqkv, bqkv, wproj, bproj, *, num_heads,
               block_q=128, block_kv=128, block_proj=128):
    B, S, D = x.shape
    assert D % num_heads == 0
    dk = D // num_heads
    block_q = min(block_q, S)
    block_kv = min(block_kv, S)
    block_proj = min(block_proj, S)
    assert block_q == block_kv, "diagonal-block bookkeeping assumes tq == tk"
    assert S % block_q == 0 and S % block_proj == 0
    scale = 1.0 / math.sqrt(dk)

    # bf16 weights: native MXU dtype on v6e/v7x, halves weight DMA / buffers.
    wqkv_b = wqkv.astype(jnp.bfloat16)
    wproj_b = wproj.astype(jnp.bfloat16)

    q, k, v = _qkv_proj(x, wqkv_b, bqkv, block_s=block_proj, scale=scale)

    # Head split: (B, S, D) -> (B, H, S, dk). Wrapper-side layout plumbing only.
    def to_heads(t):
        return t.reshape(B, S, num_heads, dk).transpose(0, 2, 1, 3)

    attn = _flash_attention(to_heads(q), to_heads(k), to_heads(v),
                            block_q=block_q, block_kv=block_kv)
    attn = attn.transpose(0, 2, 1, 3).reshape(B, S, D)          # merge heads

    return _out_proj(attn, wproj_b, bproj, block_s=block_proj, out_dtype=x.dtype)


# ----------------------------------------------------------------------------
# Pure-JAX reference (mirrors the PyTorch forward in eval mode).
# ----------------------------------------------------------------------------
def _reference(x, wqkv, bqkv, wproj, bproj, num_heads, *, bf16_operands=False):
    B, S, D = x.shape
    dk = D // num_heads
    scale = 1.0 / math.sqrt(dk)
    cast = (lambda t: t.astype(jnp.bfloat16)) if bf16_operands else (lambda t: t)

    qkv = jnp.dot(cast(x), cast(wqkv), preferred_element_type=jnp.float32) + bqkv
    q, k, v = jnp.split(qkv, 3, axis=-1)
    q = q * scale
    q, k, v = cast(q), cast(k), cast(v)
    Q = q.reshape(B, S, num_heads, dk).transpose(0, 2, 1, 3)
    K = k.reshape(B, S, num_heads, dk).transpose(0, 2, 1, 3)
    V = v.reshape(B, S, num_heads, dk).transpose(0, 2, 1, 3)
    s = jnp.einsum('bhqd,bhkd->bhqk', Q, K, preferred_element_type=jnp.float32)
    mask = jnp.tril(jnp.ones((S, S), dtype=bool))
    s = jnp.where(mask, s, -1e30)
    p = jax.nn.softmax(s, axis=-1)
    o = jnp.einsum('bhqk,bhkd->bhqd', cast(p), V,
                   preferred_element_type=jnp.float32)
    o = o.transpose(0, 2, 1, 3).reshape(B, S, D)
    return jnp.dot(cast(o), cast(wproj), preferred_element_type=jnp.float32) + bproj


if __name__ == "__main__":
    # Small but layout-realistic shapes: S and D multiples of 128, d_k = 64.
    B, S, D, H = 2, 256, 256, 4

    key = jax.random.PRNGKey(0)
    kx, k1, k2, k3, k4 = jax.random.split(key, 5)

    x = jax.random.normal(kx, (B, S, D), dtype=jnp.float32)
    # Synthetic params; shapes match c_attn: Linear(D->3D), c_proj: Linear(D->D),
    # stored as (in, out).
    wqkv = jax.random.normal(k1, (D, 3 * D), dtype=jnp.float32) / math.sqrt(D)
    bqkv = jax.random.normal(k2, (3 * D,), dtype=jnp.float32) * 0.02
    wproj = jax.random.normal(k3, (D, D), dtype=jnp.float32) / math.sqrt(D)
    bproj = jax.random.normal(k4, (D,), dtype=jnp.float32) * 0.02

    out = causal_mha(x, wqkv, bqkv, wproj, bproj, num_heads=H)
    out = jax.block_until_ready(out)
    assert out.shape == (B, S, D)

    # Tight check vs a reference using the same bf16 MXU operands / f32 accumulation.
    ref16 = _reference(x, wqkv, bqkv, wproj, bproj, H, bf16_operands=True)
    assert jnp.allclose(out, ref16, rtol=3e-2, atol=3e-2), (
        f"mismatch vs bf16 reference, max abs err {jnp.max(jnp.abs(out - ref16))}")
    # Loose sanity check vs the full-f32 reference (bounds bf16 operand error).
    ref32 = _reference(x, wqkv, bqkv, wproj, bproj, H, bf16_operands=False)
    assert jnp.allclose(out, ref32, rtol=1e-1, atol=1e-1), (
        f"mismatch vs f32 reference, max abs err {jnp.max(jnp.abs(out - ref32))}")

    print("KERNEL_OK")
</pallas_src>

<mosaic_0001>
module attributes {stable_mosaic.version = 11 : i64} {
  func.func @_qkv_proj_kernel(%arg0: i32, %arg1: i32, %arg2: memref<1x128x256xf32, #tpu.memory_space<vmem>>, %arg3: memref<256x768xbf16, #tpu.memory_space<vmem>>, %arg4: memref<1x768xf32, #tpu.memory_space<vmem>>, %arg5: memref<1x128x256xbf16, #tpu.memory_space<vmem>>, %arg6: memref<1x128x256xbf16, #tpu.memory_space<vmem>>, %arg7: memref<1x128x256xbf16, #tpu.memory_space<vmem>>) attributes {dimension_semantics = [#tpu.dimension_semantics<parallel>, #tpu.dimension_semantics<parallel>], iteration_bounds = array<i64: 2, 2>, scalar_prefetch = 0 : i64, scratch_operands = 0 : i64, tpu.core_type = #tpu.core_type<tc>, window_params = [{transform_indices = @transform_0, window_bounds = array<i64: 1, 128, 256>}, {pipeline_mode = #tpu.pipeline_mode<synchronous>, transform_indices = @transform_1, window_bounds = array<i64: 256, 768>}, {pipeline_mode = #tpu.pipeline_mode<synchronous>, transform_indices = @transform_2, window_bounds = array<i64: 1, 768>}, {transform_indices = @transform_3, window_bounds = array<i64: 1, 128, 256>}, {transform_indices = @transform_4, window_bounds = array<i64: 1, 128, 256>}, {transform_indices = @transform_5, window_bounds = array<i64: 1, 128, 256>}]} {
    %c0 = arith.constant 0 : index
    %c0_0 = arith.constant 0 : index
    %c0_1 = arith.constant 0 : index
    %0 = vector.load %arg2[%c0, %c0_0, %c0_1] : memref<1x128x256xf32, #tpu.memory_space<vmem>>, vector<1x128x256xf32>
    %1 = vector.shape_cast %0 : vector<1x128x256xf32> to vector<128x256xf32>
    %2 = arith.truncf %1 : vector<128x256xf32> to vector<128x256xbf16>
    %c0_2 = arith.constant 0 : index
    %c0_3 = arith.constant 0 : index
    %3 = vector.load %arg3[%c0_2, %c0_3] : memref<256x768xbf16, #tpu.memory_space<vmem>>, vector<256x768xbf16>
    %cst = arith.constant dense<0.000000e+00> : vector<128x768xf32>
    %4 = tpu.matmul %2, %3, %cst {dimension_numbers = #tpu.dot_dimension_numbers<[1], [0], [0], [1], [0, 0, 1, 1], [], []>} : vector<128x256xbf16>, vector<256x768xbf16>, vector<128x768xf32> -> vector<128x768xf32>
    %c0_4 = arith.constant 0 : index
    %c0_5 = arith.constant 0 : index
    %5 = vector.load %arg4[%c0_4, %c0_5] : memref<1x768xf32, #tpu.memory_space<vmem>>, vector<1x768xf32>
    %6 = vector.shape_cast %5 : vector<1x768xf32> to vector<768xf32>
    %7 = vector.shape_cast %6 : vector<768xf32> to vector<1x768xf32>
    %8 = vector.broadcast %7 : vector<1x768xf32> to vector<128x768xf32>
    %9 = arith.addf %4, %8 : vector<128x768xf32>
    %10 = vector.extract_strided_slice %9 {offsets = [0, 0], sizes = [128, 256], strides = [1, 1]} : vector<128x768xf32> to vector<128x256xf32>
    %cst_6 = arith.constant 1.250000e-01 : f32
    %11 = vector.broadcast %cst_6 : f32 to vector<128x256xf32>
    %12 = arith.mulf %10, %11 : vector<128x256xf32>
    %13 = arith.truncf %12 : vector<128x256xf32> to vector<128x256xbf16>
    %c0_7 = arith.constant 0 : index
    %c0_8 = arith.constant 0 : index
    %c0_9 = arith.constant 0 : index
    %14 = vector.load %arg5[%c0_7, %c0_8, %c0_9] : memref<1x128x256xbf16, #tpu.memory_space<vmem>>, vector<1x128x256xbf16>
    %15 = vector.shape_cast %14 : vector<1x128x256xbf16> to vector<128x256xbf16>
    %16 = vector.shape_cast %13 : vector<128x256xbf16> to vector<1x128x256xbf16>
    tpu.vector_store %arg5[%c0_7, %c0_8, %c0_9], %16 {strides = array<i32>} : memref<1x128x256xbf16, #tpu.memory_space<vmem>>, vector<1x128x256xbf16>,
    %17 = vector.extract_strided_slice %9 {offsets = [0, 256], sizes = [128, 256], strides = [1, 1]} : vector<128x768xf32> to vector<128x256xf32>
    %18 = arith.truncf %17 : vector<128x256xf32> to vector<128x256xbf16>
    %c0_10 = arith.constant 0 : index
    %c0_11 = arith.constant 0 : index
    %c0_12 = arith.constant 0 : index
    %19 = vector.load %arg6[%c0_10, %c0_11, %c0_12] : memref<1x128x256xbf16, #tpu.memory_space<vmem>>, vector<1x128x256xbf16>
    %20 = vector.shape_cast %19 : vector<1x128x256xbf16> to vector<128x256xbf16>
    %21 = vector.shape_cast %18 : vector<128x256xbf16> to vector<1x128x256xbf16>
    tpu.vector_store %arg6[%c0_10, %c0_11, %c0_12], %21 {strides = array<i32>} : memref<1x128x256xbf16, #tpu.memory_space<vmem>>, vector<1x128x256xbf16>,
    %22 = vector.extract_strided_slice %9 {offsets = [0, 512], sizes = [128, 256], strides = [1, 1]} : vector<128x768xf32> to vector<128x256xf32>
    %23 = arith.truncf %22 : vector<128x256xf32> to vector<128x256xbf16>
    %c0_13 = arith.constant 0 : index
    %c0_14 = arith.constant 0 : index
    %c0_15 = arith.constant 0 : index
    %24 = vector.load %arg7[%c0_13, %c0_14, %c0_15] : memref<1x128x256xbf16, #tpu.memory_space<vmem>>, vector<1x128x256xbf16>
    %25 = vector.shape_cast %24 : vector<1x128x256xbf16> to vector<128x256xbf16>
    %26 = vector.shape_cast %23 : vector<128x256xbf16> to vector<1x128x256xbf16>
    tpu.vector_store %arg7[%c0_13, %c0_14, %c0_15], %26 {strides = array<i32>} : memref<1x128x256xbf16, #tpu.memory_space<vmem>>, vector<1x128x256xbf16>,
    return
  }
  func.func @transform_0(%arg0: i32, %arg1: i32) -> (i32, i32, i32) {
    %c0_i32 = arith.constant 0 : i32
    %c0_i32_0 = arith.constant 0 : i32
    return %arg0, %arg1, %c0_i32 : i32, i32, i32
  }
  func.func @transform_1(%arg0: i32, %arg1: i32) -> (i32, i32) {
    %c0_i32 = arith.constant 0 : i32
    %c0_i32_0 = arith.constant 0 : i32
    %c0_i32_1 = arith.constant 0 : i32
    return %c0_i32, %c0_i32_0 : i32, i32
  }
  func.func @transform_2(%arg0: i32, %arg1: i32) -> (i32, i32) {
    %c0_i32 = arith.constant 0 : i32
    %c0_i32_0 = arith.constant 0 : i32
    %c0_i32_1 = arith.constant 0 : i32
    return %c0_i32, %c0_i32_0 : i32, i32
  }
  func.func @transform_3(%arg0: i32, %arg1: i32) -> (i32, i32, i32) {
    %c0_i32 = arith.constant 0 : i32
    %c0_i32_0 = arith.constant 0 : i32
    return %arg0, %arg1, %c0_i32 : i32, i32, i32
  }
  func.func @transform_4(%arg0: i32, %arg1: i32) -> (i32, i32, i32) {
    %c0_i32 = arith.constant 0 : i32
    %c0_i32_0 = arith.constant 0 : i32
    return %arg0, %arg1, %c0_i32 : i32, i32, i32
  }
  func.func @transform_5(%arg0: i32, %arg1: i32) -> (i32, i32, i32) {
    %c0_i32 = arith.constant 0 : i32
    %c0_i32_0 = arith.constant 0 : i32
    return %arg0, %arg1, %c0_i32 : i32, i32, i32
  }
}

</mosaic_0001>

<llo_original>
// kernel: tpu_custom_call.1
$region0: #{tpu_custom_call.1}
  #allocation0 [shape = 'u32[]', space=smem, size = 0x4, offset = 0x4, fixed_abs, tag = 'smem constant byte address 0x4 - core index']
  #allocation1 [shape = 'u32[72,128]{1,0:T(1,128)}', space=vmem, size = 0x9000, scoped, tag = 'internal scratch']
  %s0 = inlined_call_operand.hbm [shape: f32[2,256,256], index: 0, kind: input, shape index: {}]
  %s1 = inlined_call_operand.hbm [shape: bf16[256,768], index: 1, kind: input, shape index: {}]
  %s2 = inlined_call_operand.hbm [shape: f32[1,768], index: 2, kind: input, shape index: {}]
  %s3 = inlined_call_operand.hbm [shape: bf16[2,256,256], index: 3, kind: output, shape index: {0}]
  %s4 = inlined_call_operand.hbm [shape: bf16[2,256,256], index: 4, kind: output, shape index: {1}]
  %s5 = inlined_call_operand.hbm [shape: bf16[2,256,256], index: 5, kind: output, shape index: {2}]
  %6 = xla_tuple %s3, %s4, %s5
  %s7 = sld [smem:[#allocation0]]
  $region73: #{tpu_custom_call.1} parent=0
    _
  %s9 = ssub.s32 1, %s7
  %s10 = scalar_select 0, %s9, %s7
  $region1: #{tpu_custom_call.1} parent=0
    #allocation2 [shape = 'u8[262144]{0}', space=vmem, size = 0x40000, scoped, tag = 'input window, operand 0']
    #allocation3 [shape = 's32[2]{0}', space=sflag, size = 0x8, scoped, tag = 'scoped memory for tpu_custom_call.1']
    #allocation4 [shape = 's32[2]{0}', space=sflag, size = 0x8, scoped, tag = 'scoped memory for tpu_custom_call.1']
    #allocation5 [shape = 'u8[393216]{0}', space=vmem, size = 0x60000, scoped, tag = 'input window, operand 1, single buffered']
    #allocation6 [shape = 's32[1]{0}', space=sflag, size = 0x4, scoped, tag = 'scoped memory for tpu_custom_call.1']
    #allocation7 [shape = 'u8[3072]{0}', space=vmem, size = 0xc00, scoped, tag = 'input window, operand 2, single buffered']
    #allocation8 [shape = 'u8[131072]{0}', space=vmem, size = 0x20000, scoped, tag = 'output window, operand 0']
    #allocation9 [shape = 'u8[131072]{0}', space=vmem, size = 0x20000, scoped, tag = 'output window, operand 1']
    #allocation10 [shape = 's32[2]{0}', space=sflag, size = 0x8, scoped, tag = 'scoped memory for tpu_custom_call.1']
    #allocation11 [shape = 'u8[131072]{0}', space=vmem, size = 0x20000, scoped, tag = 'output window, operand 2']
    %11 = vsyncpa [#allocation3], 0
    %s12 = scalar_lea.sflag [#allocation3], 1
    %13 = vsyncpa %s12, 0
    %14 = vsyncpa [#allocation6], 0
    %15 = vsyncpa [#allocation4], 0
    %s16 = scalar_lea.sflag [#allocation4], 1
    %17 = vsyncpa %s16, 0
    %18 = vsyncpa [#allocation10], 0
    %s19 = scalar_lea.sflag [#allocation10], 1
    %20 = vsyncpa %s19, 0
    loop: start=0, step=1, limit=6
    $region2: #{tpu_custom_call.1} parent=1 // loop_pre_header
      _
    $region3: #{tpu_custom_call.1} parent=1 // loop_header
      %s22 = sphi 0, %s26
      %p23 = scmp.ge.s32.totalorder %s22, 6
      %s29 = sphi 0, %s41
      %s30 = sphi 0, %s37
      %s31 = sphi 0, %s29
      %s32 = sphi 0, %s30
      %s33 = sphi 0, %s31
      %s34 = sphi 0, %s32
      %s46 = sphi 0, %s48
      %s49 = sphi 0, %s46
      %s50 = sphi 0, %s49
      %s66 = sphi 0, %s50
      %s70 = sphi 0, %s70
      %s72 = sphi 0, %s70
      %s73 = sphi 0, %s72
      %s87 = sphi 0, %s73
      %s91 = sphi 0, %s91
      %s93 = sphi 0, %s91
      %s94 = sphi 0, %s93
      %s108 = sphi 0, %s94
      %s116 = sphi 0, %s118
      %s119 = sphi 0, %s116
      %s120 = sphi 0, %s119
      %s136 = sphi 0, %s120
      %s144 = sphi 0, %s146
      %s147 = sphi 0, %s144
      %s148 = sphi 0, %s147
      %s164 = sphi 0, %s148
      %s172 = sphi 0, %s174
      %s175 = sphi 0, %s172
      %s176 = sphi 0, %s175
      %s192 = sphi 0, %s176
    $region4: #{tpu_custom_call.1} parent=1 // loop_header_branch
      %25 = sbr.rel (%p23) target = $region8
    $region5: #{tpu_custom_call.1} parent=1 // loop_body
      %s27 = ssub.s32 %s22, 1
      %s28 = ssub.s32 %s22, 2
      %s35 = sadd.s32 1, %s30
      %p36 = scmp.ge.s32.totalorder %s35, 2
      %s37 = scalar_select %p36, 0, %s35
      %s38 = sadd.s32 1, %s29
      %s39 = scalar_select %p36, %s38, %s29
      %p40 = scmp.ge.s32.totalorder %s39, 2
      %s41 = scalar_select %p40, 0, %s39
      %s42 = ssub.s32 %s29, %s41
      %s43 = ssub.s32 %s30, %s37
      %s44 = sor.u32 %s42, %s43
      %p45 = scmp.eq.s32.totalorder %s44, 0
      %s47 = sadd.s32 %s46, 1
      %s48 = scalar_select %p45, %s46, %s47
      %p51 = pneg %p45
      %p52 = scmp.eq.s32.totalorder %s22, 3
      %p53 = por %p51, %p52
      %p54 = scmp.ne.s32.totalorder %s46, %s49
      %p55 = scmp.eq.s32.totalorder %s22, 0
      %p56 = por %p54, %p55
      %p57 = scmp.ne.s32.totalorder %s46, %s49
      %p58 = scmp.eq.s32.totalorder %s27, 3
      %p59 = por %p57, %p58
      %p60 = scmp.ne.s32.totalorder %s49, %s50
      %p61 = scmp.eq.s32.totalorder %s27, 0
      %p62 = por %p60, %p61
      %p63 = scmp.ne.s32.totalorder %s49, %s50
      %p64 = scmp.eq.s32.totalorder %s28, 3
      %p65 = por %p63, %p64
      %p67 = scmp.ne.s32.totalorder %s50, %s66
      %p68 = scmp.eq.s32.totalorder %s28, 0
      %p69 = por %p67, %p68
      %s71 = sadd.s32 %s70, 1
      %p74 = scmp.eq.s32.totalorder %s22, 3
      %p75 = scmp.ne.s32.totalorder %s70, %s72
      %p76 = scmp.eq.s32.totalorder %s22, 0
      %p77 = por %p75, %p76
      %p78 = scmp.ne.s32.totalorder %s70, %s72
      %p79 = scmp.eq.s32.totalorder %s27, 3
      %p80 = por %p78, %p79
      %p81 = scmp.ne.s32.totalorder %s72, %s73
      %p82 = scmp.eq.s32.totalorder %s27, 0
      %p83 = por %p81, %p82
      %p84 = scmp.ne.s32.totalorder %s72, %s73
      %p85 = scmp.eq.s32.totalorder %s28, 3
      %p86 = por %p84, %p85
      %p88 = scmp.ne.s32.totalorder %s73, %s87
      %p89 = scmp.eq.s32.totalorder %s28, 0
      %p90 = por %p88, %p89
      %s92 = sadd.s32 %s91, 1
      %p95 = scmp.eq.s32.totalorder %s22, 3
      %p96 = scmp.ne.s32.totalorder %s91, %s93
      %p97 = scmp.eq.s32.totalorder %s22, 0
      %p98 = por %p96, %p97
      %p99 = scmp.ne.s32.totalorder %s91, %s93
      %p100 = scmp.eq.s32.totalorder %s27, 3
      %p101 = por %p99, %p100
      %p102 = scmp.ne.s32.totalorder %s93, %s94
      %p103 = scmp.eq.s32.totalorder %s27, 0
      %p104 = por %p102, %p103
      %p105 = scmp.ne.s32.totalorder %s93, %s94
      %p106 = scmp.eq.s32.totalorder %s28, 3
      %p107 = por %p105, %p106
      %p109 = scmp.ne.s32.totalorder %s94, %s108
      %p110 = scmp.eq.s32.totalorder %s28, 0
      %p111 = por %p109, %p110
      %s112 = ssub.s32 %s29, %s41
      %s113 = ssub.s32 %s30, %s37
      %s114 = sor.u32 %s112, %s113
      %p115 = scmp.eq.s32.totalorder %s114, 0
      %s117 = sadd.s32 %s116, 1
      %s118 = scalar_select %p115, %s116, %s117
      %p121 = pneg %p115
      %p122 = scmp.eq.s32.totalorder %s22, 3
      %p123 = por %p121, %p122
      %p124 = scmp.ne.s32.totalorder %s116, %s119
      %p125 = scmp.eq.s32.totalorder %s22, 0
      %p126 = por %p124, %p125
      %p127 = scmp.ne.s32.totalorder %s116, %s119
      %p128 = scmp.eq.s32.totalorder %s27, 3
      %p129 = por %p127, %p128
      %p130 = scmp.ne.s32.totalorder %s119, %s120
      %p131 = scmp.eq.s32.totalorder %s27, 0
      %p132 = por %p130, %p131
      %p133 = scmp.ne.s32.totalorder %s119, %s120
      %p134 = scmp.eq.s32.totalorder %s28, 3
      %p135 = por %p133, %p134
      %p137 = scmp.ne.s32.totalorder %s120, %s136
      %p138 = scmp.eq.s32.totalorder %s28, 0
      %p139 = por %p137, %p138
      %s140 = ssub.s32 %s29, %s41
      %s141 = ssub.s32 %s30, %s37
      %s142 = sor.u32 %s140, %s141
      %p143 = scmp.eq.s32.totalorder %s142, 0
      %s145 = sadd.s32 %s144, 1
      %s146 = scalar_select %p143, %s144, %s145
      %p149 = pneg %p143
      %p150 = scmp.eq.s32.totalorder %s22, 3
      %p151 = por %p149, %p150
      %p152 = scmp.ne.s32.totalorder %s144, %s147
      %p153 = scmp.eq.s32.totalorder %s22, 0
      %p154 = por %p152, %p153
      %p155 = scmp.ne.s32.totalorder %s144, %s147
      %p156 = scmp.eq.s32.totalorder %s27, 3
      %p157 = por %p155, %p156
      %p158 = scmp.ne.s32.totalorder %s147, %s148
      %p159 = scmp.eq.s32.totalorder %s27, 0
      %p160 = por %p158, %p159
      %p161 = scmp.ne.s32.totalorder %s147, %s148
      %p162 = scmp.eq.s32.totalorder %s28, 3
      %p163 = por %p161, %p162
      %p165 = scmp.ne.s32.totalorder %s148, %s164
      %p166 = scmp.eq.s32.totalorder %s28, 0
      %p167 = por %p165, %p166
      %s168 = ssub.s32 %s29, %s41
      %s169 = ssub.s32 %s30, %s37
      %s170 = sor.u32 %s168, %s169
      %p171 = scmp.eq.s32.totalorder %s170, 0
      %s173 = sadd.s32 %s172, 1
      %s174 = scalar_select %p171, %s172, %s173
      %p177 = pneg %p171
      %p178 = scmp.eq.s32.totalorder %s22, 3
      %p179 = por %p177, %p178
      %p180 = scmp.ne.s32.totalorder %s172, %s175
      %p181 = scmp.eq.s32.totalorder %s22, 0
      %p182 = por %p180, %p181
      %p183 = scmp.ne.s32.totalorder %s172, %s175
      %p184 = scmp.eq.s32.totalorder %s27, 3
      %p185 = por %p183, %p184
      %p186 = scmp.ne.s32.totalorder %s175, %s176
      %p187 = scmp.eq.s32.totalorder %s27, 0
      %p188 = por %p186, %p187
      %p189 = scmp.ne.s32.totalorder %s175, %s176
      %p190 = scmp.eq.s32.totalorder %s28, 3
      %p191 = por %p189, %p190
      %p193 = scmp.ne.s32.totalorder %s176, %s192
      %p194 = scmp.eq.s32.totalorder %s28, 0
      %p195 = por %p193, %p194
      %p196 = scmp.le.s32.totalorder 1, %s22
      %p197 = scmp.lt.s32.totalorder %s22, 5
      %p198 = pnand %p196, %p197
      %p199 = pneg %p198
      // Predicated region
      $region9: #{tpu_custom_call.1} parent=5 // pred_check
        _
      $region10: #{tpu_custom_call.1} parent=5 // pred_check_branch
        %201 = sbr.rel (%p198) target = $region12
      $region11: #{tpu_custom_call.1} parent=5 // pred_region
        %s202 = ssub.s32 %s22, 1
        // Predicated region
        $region13: #{tpu_custom_call.1} parent=11 // pred_check
          %p203 = pneg %p83
        $region14: #{tpu_custom_call.1} parent=11 // pred_check_branch
          %205 = sbr.rel (%p203) target = $region16
        $region15: #{tpu_custom_call.1} parent=11 // pred_region
          %207 = vsyncadd [#allocation6], 0
          %s208 = sshll.u32 %s1, 4
          %s209 = int_to_ptr.hbm [resolvable:$true] %s208
          %s210 = sshll.u32 [#allocation5], 4
          %s211 = int_to_ptr.vmem [resolvable:$true] %s210
          %216 = dma.hbm_to_vmem [thread:$0]  %s209, 12288, %s211, [#allocation6], 384, 384, 24
        $region16: #{tpu_custom_call.1} parent=11 // pred_fallthru
          _
        // Predicated region
        $region17: #{tpu_custom_call.1} parent=11 // pred_check
          %p217 = pneg %p104
        $region18: #{tpu_custom_call.1} parent=11 // pred_check_branch
          %219 = sbr.rel (%p217) target = $region20
        $region19: #{tpu_custom_call.1} parent=11 // pred_region
          %221 = vsyncadd [#allocation6], 0
          %s223 = sshll.u32 %s2, 4
          %s224 = int_to_ptr.hbm [resolvable:$true] %s223
          %s225 = sshll.u32 [#allocation7], 4
          %s226 = int_to_ptr.vmem [resolvable:$true] %s225
          %228 = dma.hbm_to_vmem [thread:$0]  %s224, 96, %s226, [#allocation6]
        $region20: #{tpu_custom_call.1} parent=11 // pred_fallthru
          _
      $region12: #{tpu_custom_call.1} parent=5 // pred_fallthru
        _
      %p229 = scmp.lt.s32.totalorder %s22, 4
      // Predicated region
      $region21: #{tpu_custom_call.1} parent=5 // pred_check
        %p230 = pneg %p229
      $region22: #{tpu_custom_call.1} parent=5 // pred_check_branch
        %232 = sbr.rel (%p230) target = $region24
      $region23: #{tpu_custom_call.1} parent=5 // pred_region
        // Predicated region
        $region25: #{tpu_custom_call.1} parent=23 // pred_check
          %p233 = pneg %p56
        $region26: #{tpu_custom_call.1} parent=23 // pred_check_branch
          %235 = sbr.rel (%p233) target = $region28
        $region27: #{tpu_custom_call.1} parent=23 // pred_region
          %s236 = sand.u32 %s46, 1
          %s237 = scalar_lea.sflag [#allocation3], %s236
          %s238 = sand.u32 %s46, 1
          %s239 = smul.addr %s238, 256
          %s240 = scalar_lea.vmem [#allocation2], %s239
          %s241 = smul.u32 16, %s30
          %243 = vsyncadd %s237, 0
          %s244 = smul.addr %s241, 2
          %s245 = smul.addr %s29, 64
          %s246 = sadd.s32 %s244, %s245
          %s247 = smul.addr %s246, 8
          %s248 = scalar_lea.hbm %s0, %s247
          %s249 = sshll.u32 %s248, 4
          %s250 = int_to_ptr.hbm [resolvable:$true] %s249
          %s251 = sshll.u32 %s240, 4
          %s252 = int_to_ptr.vmem [resolvable:$true] %s251
          %257 = dma.hbm_to_vmem [thread:$0]  %s250, 4096, %s252, %s237, 256, 256, 16
        $region28: #{tpu_custom_call.1} parent=23 // pred_fallthru
          _
      $region24: #{tpu_custom_call.1} parent=5 // pred_fallthru
        _
      %p258 = scmp.le.s32.totalorder 1, %s22
      %p259 = scmp.lt.s32.totalorder %s22, 5
      %p260 = pnand %p258, %p259
      %p261 = pneg %p260
      // Predicated region
      $region29: #{tpu_custom_call.1} parent=5 // pred_check
        _
      $region30: #{tpu_custom_call.1} parent=5 // pred_check_branch
        %263 = sbr.rel (%p260) target = $region32
      $region31: #{tpu_custom_call.1} parent=5 // pred_region
        %s264 = ssub.s32 %s22, 1
        %s265 = sand.u32 %s49, 1
        %s266 = scalar_lea.sflag [#allocation3], %s265
        %s267 = sand.u32 %s49, 1
        %s268 = smul.addr %s267, 256
        %s269 = scalar_lea.vmem [#allocation2], %s268
        // Predicated region
        $region33: #{tpu_custom_call.1} parent=31 // pred_check
          %p270 = pneg %p62
        $region34: #{tpu_custom_call.1} parent=31 // pred_check_branch
          %272 = sbr.rel (%p270) target = $region36
        $region35: #{tpu_custom_call.1} parent=31 // pred_region
          %274 = dma.done %s266, 4096
        $region36: #{tpu_custom_call.1} parent=31 // pred_fallthru
          _
        // Predicated region
        $region37: #{tpu_custom_call.1} parent=31 // pred_check
          %p275 = pneg %p83
        $region38: #{tpu_custom_call.1} parent=31 // pred_check_branch
          %277 = sbr.rel (%p275) target = $region40
        $region39: #{tpu_custom_call.1} parent=31 // pred_region
          %279 = dma.done [#allocation6], 12288
        $region40: #{tpu_custom_call.1} parent=31 // pred_fallthru
          _
        // Predicated region
        $region41: #{tpu_custom_call.1} parent=31 // pred_check
          %p280 = pneg %p104
        $region42: #{tpu_custom_call.1} parent=31 // pred_check_branch
          %282 = sbr.rel (%p280) target = $region44
        $region43: #{tpu_custom_call.1} parent=31 // pred_region
          %284 = dma.done [#allocation6], 96
        $region44: #{tpu_custom_call.1} parent=31 // pred_fallthru
          _
        %s285 = sand.u32 %s49, 1
        %s286 = scalar_lea.sflag [#allocation3], %s285
        %s287 = sand.u32 %s49, 1
        %s288 = smul.addr %s287, 256
        %s289 = scalar_lea.vmem [#allocation2], %s288
        %p290 = pneg %p62
        %p291 = pneg %p59
        %p292 = pneg %p83
        %p293 = pneg %p80
        %p294 = pneg %p104
        %p295 = pneg %p101
        %p296 = pneg %p132
        %p297 = pneg %p129
        %s298 = sand.u32 %s119, 1
        %s299 = scalar_lea.sflag [#allocation4], %s298
        %s300 = sand.u32 %s119, 1
        %s301 = smul.addr %s300, 128
        %s302 = scalar_lea.vmem [#allocation8], %s301
        %p303 = pneg %p160
        %p304 = pneg %p157
        %s305 = sand.u32 %s27, 1
        %s306 = scalar_lea.sflag [#allocation10], %s305
        %s307 = sand.u32 %s147, 1
        %s308 = smul.addr %s307, 128
        %s309 = scalar_lea.vmem [#allocation9], %s308
        %p310 = pneg %p188
        %p311 = pneg %p185
        %s312 = sand.u32 %s27, 1
        %s313 = scalar_lea.sflag [#allocation10], %s312
        %s314 = sand.u32 %s175, 1
        %s315 = smul.addr %s314, 128
        %s316 = scalar_lea.vmem [#allocation11], %s315
        %s317 = smul.u32 16, %s32
        %s318 = smul.u32 16, %s32
        %s319 = smul.u32 16, %s32
        %s320 = smul.u32 16, %s32
        %v321 = vld [vmem:[%s269] sm:$0xff]
        %v322 = vld [vmem:[%s269 + $0x8] sm:$0xff]
        %v323 = vld [vmem:[%s269 + $0x10] sm:$0xff]
        %v324 = vld [vmem:[%s269 + $0x18] sm:$0xff]
        %v325 = vld [vmem:[%s269 + $0x20] sm:$0xff]
        %v326 = vld [vmem:[%s269 + $0x28] sm:$0xff]
        %v327 = vld [vmem:[%s269 + $0x30] sm:$0xff]
        %v328 = vld [vmem:[%s269 + $0x38] sm:$0xff]
        %v329 = vld [vmem:[%s269 + $0x40] sm:$0xff]
        %v330 = vld [vmem:[%s269 + $0x48] sm:$0xff]
        %v331 = vld [vmem:[%s269 + $0x50] sm:$0xff]
        %v332 = vld [vmem:[%s269 + $0x58] sm:$0xff]
        %v333 = vld [vmem:[%s269 + $0x60] sm:$0xff]
        %v334 = vld [vmem:[%s269 + $0x68] sm:$0xff]
        %v335 = vld [vmem:[%s269 + $0x70] sm:$0xff]
        %v336 = vld [vmem:[%s269 + $0x78] sm:$0xff]
        %v337 = vld [vmem:[%s269 + $0x80] sm:$0xff]
        %v338 = vld [vmem:[%s269 + $0x88] sm:$0xff]
        %v339 = vld [vmem:[%s269 + $0x90] sm:$0xff]
        %v340 = vld [vmem:[%s269 + $0x98] sm:$0xff]
        %v341 = vld [vmem:[%s269 + $0xa0] sm:$0xff]
        %v342 = vld [vmem:[%s269 + $0xa8] sm:$0xff]
        %v343 = vld [vmem:[%s269 + $0xb0] sm:$0xff]
        %v344 = vld [vmem:[%s269 + $0xb8] sm:$0xff]
        %v345 = vld [vmem:[%s269 + $0xc0] sm:$0xff]
        %v346 = vld [vmem:[%s269 + $0xc8] sm:$0xff]
        %v347 = vld [vmem:[%s269 + $0xd0] sm:$0xff]
        %v348 = vld [vmem:[%s269 + $0xd8] sm:$0xff]
        %v349 = vld [vmem:[%s269 + $0xe0] sm:$0xff]
        %v350 = vld [vmem:[%s269 + $0xe8] sm:$0xff]
        %v351 = vld [vmem:[%s269 + $0xf0] sm:$0xff]
        %v352 = vld [vmem:[%s269 + $0xf8] sm:$0xff]
        %v353 = vpack.c.bf16 %v323, %v321
        %v354 = vpack.c.bf16 %v324, %v322
        %v355 = vpack.c.bf16 %v327, %v325
        %v356 = vpack.c.bf16 %v328, %v326
        %v357 = vpack.c.bf16 %v331, %v329
        %v358 = vpack.c.bf16 %v332, %v330
        %v359 = vpack.c.bf16 %v335, %v333
        %v360 = vpack.c.bf16 %v336, %v334
        %v361 = vpack.c.bf16 %v339, %v337
        %v362 = vpack.c.bf16 %v340, %v338
        %v363 = vpack.c.bf16 %v343, %v341
        %v364 = vpack.c.bf16 %v344, %v342
        %v365 = vpack.c.bf16 %v347, %v345
        %v366 = vpack.c.bf16 %v348, %v346
        %v367 = vpack.c.bf16 %v351, %v349
        %v368 = vpack.c.bf16 %v352, %v350
        %v369 = vld [vmem:[#allocation5] sm:$0xff]
        %v370 = vld [vmem:[#allocation5 + $0x8] sm:$0xff]
        %v371 = vld [vmem:[#allocation5 + $0x10] sm:$0xff]
        %v372 = vld [vmem:[#allocation5 + $0x18] sm:$0xff]
        %v373 = vld [vmem:[#allocation5 + $0x20] sm:$0xff]
        %v374 = vld [vmem:[#allocation5 + $0x28] sm:$0xff]
        %v375 = vld [vmem:[#allocation5 + $0x30] sm:$0xff]
        %v376 = vld [vmem:[#allocation5 + $0x38] sm:$0xff]
        %v377 = vld [vmem:[#allocation5 + $0x40] sm:$0xff]
        %v378 = vld [vmem:[#allocation5 + $0x48] sm:$0xff]
        %v379 = vld [vmem:[#allocation5 + $0x50] sm:$0xff]
        %v380 = vld [vmem:[#allocation5 + $0x58] sm:$0xff]
        %v381 = vld [vmem:[#allocation5 + $0x60] sm:$0xff]
        %v382 = vld [vmem:[#allocation5 + $0x68] sm:$0xff]
        %v383 = vld [vmem:[#allocation5 + $0x70] sm:$0xff]
        %v384 = vld [vmem:[#allocation5 + $0x78] sm:$0xff]
        %v385 = vld [vmem:[#allocation5 + $0x80] sm:$0xff]
        %v386 = vld [vmem:[#allocation5 + $0x88] sm:$0xff]
        %v387 = vld [vmem:[#allocation5 + $0x90] sm:$0xff]
        %v388 = vld [vmem:[#allocation5 + $0x98] sm:$0xff]
        %v389 = vld [vmem:[#allocation5 + $0xa0] sm:$0xff]
        %v390 = vld [vmem:[#allocation5 + $0xa8] sm:$0xff]
        %v391 = vld [vmem:[#allocation5 + $0xb0] sm:$0xff]
        %v392 = vld [vmem:[#allocation5 + $0xb8] sm:$0xff]
        %v393 = vld [vmem:[#allocation5 + $0xc0] sm:$0xff]
        %v394 = vld [vmem:[#allocation5 + $0xc8] sm:$0xff]
        %v395 = vld [vmem:[#allocation5 + $0xd0] sm:$0xff]
        %v396 = vld [vmem:[#allocation5 + $0xd8] sm:$0xff]
        %v397 = vld [vmem:[#allocation5 + $0xe0] sm:$0xff]
        %v398 = vld [vmem:[#allocation5 + $0xe8] sm:$0xff]
        %v399 = vld [vmem:[#allocation5 + $0xf0] sm:$0xff]
        %v400 = vld [vmem:[#allocation5 + $0xf8] sm:$0xff]
        %v401 = vld [vmem:[#allocation5 + $0x100] sm:$0xff]
        %v402 = vld [vmem:[#allocation5 + $0x108] sm:$0xff]
        %v403 = vld [vmem:[#allocation5 + $0x110] sm:$0xff]
        %v404 = vld [vmem:[#allocation5 + $0x118] sm:$0xff]
        %v405 = vld [vmem:[#allocation5 + $0x120] sm:$0xff]
        %v406 = vld [vmem:[#allocation5 + $0x128] sm:$0xff]
        %v407 = vld [vmem:[#allocation5 + $0x130] sm:$0xff]
        %v408 = vld [vmem:[#allocation5 + $0x138] sm:$0xff]
        %v409 = vld [vmem:[#allocation5 + $0x140] sm:$0xff]
        %v410 = vld [vmem:[#allocation5 + $0x148] sm:$0xff]
        %v411 = vld [vmem:[#allocation5 + $0x150] sm:$0xff]
        %v412 = vld [vmem:[#allocation5 + $0x158] sm:$0xff]
        %v413 = vld [vmem:[#allocation5 + $0x160] sm:$0xff]
        %v414 = vld [vmem:[#allocation5 + $0x168] sm:$0xff]
        %v415 = vld [vmem:[#allocation5 + $0x170] sm:$0xff]
        %v416 = vld [vmem:[#allocation5 + $0x178] sm:$0xff]
        %v417 = vld [vmem:[#allocation5 + $0x180] sm:$0xff]
        %v418 = vld [vmem:[#allocation5 + $0x188] sm:$0xff]
        %v419 = vld [vmem:[#allocation5 + $0x190] sm:$0xff]
        %v420 = vld [vmem:[#allocation5 + $0x198] sm:$0xff]
        %v421 = vld [vmem:[#allocation5 + $0x1a0] sm:$0xff]
        %v422 = vld [vmem:[#allocation5 + $0x1a8] sm:$0xff]
        %v423 = vld [vmem:[#allocation5 + $0x1b0] sm:$0xff]
        %v424 = vld [vmem:[#allocation5 + $0x1b8] sm:$0xff]
        %v425 = vld [vmem:[#allocation5 + $0x1c0] sm:$0xff]
        %v426 = vld [vmem:[#allocation5 + $0x1c8] sm:$0xff]
        %v427 = vld [vmem:[#allocation5 + $0x1d0] sm:$0xff]
        %v428 = vld [vmem:[#allocation5 + $0x1d8] sm:$0xff]
        %v429 = vld [vmem:[#allocation5 + $0x1e0] sm:$0xff]
        %v430 = vld [vmem:[#allocation5 + $0x1e8] sm:$0xff]
        %v431 = vld [vmem:[#allocation5 + $0x1f0] sm:$0xff]
        %v432 = vld [vmem:[#allocation5 + $0x1f8] sm:$0xff]
        %v433 = vld [vmem:[#allocation5 + $0x200] sm:$0xff]
        %v434 = vld [vmem:[#allocation5 + $0x208] sm:$0xff]
        %v435 = vld [vmem:[#allocation5 + $0x210] sm:$0xff]
        %v436 = vld [vmem:[#allocation5 + $0x218] sm:$0xff]
        %v437 = vld [vmem:[#allocation5 + $0x220] sm:$0xff]
        %v438 = vld [vmem:[#allocation5 + $0x228] sm:$0xff]
        %v439 = vld [vmem:[#allocation5 + $0x230] sm:$0xff]
        %v440 = vld [vmem:[#allocation5 + $0x238] sm:$0xff]
        %v441 = vld [vmem:[#allocation5 + $0x240] sm:$0xff]
        %v442 = vld [vmem:[#allocation5 + $0x248] sm:$0xff]
        %v443 = vld [vmem:[#allocation5 + $0x250] sm:$0xff]
        %v444 = vld [vmem:[#allocation5 + $0x258] sm:$0xff]
        %v445 = vld [vmem:[#allocation5 + $0x260] sm:$0xff]
        %v446 = vld [vmem:[#allocation5 + $0x268] sm:$0xff]
        %v447 = vld [vmem:[#allocation5 + $0x270] sm:$0xff]
        %v448 = vld [vmem:[#allocation5 + $0x278] sm:$0xff]
        %v449 = vld [vmem:[#allocation5 + $0x280] sm:$0xff]
        %v450 = vld [vmem:[#allocation5 + $0x288] sm:$0xff]
        %v451 = vld [vmem:[#allocation5 + $0x290] sm:$0xff]
        %v452 = vld [vmem:[#allocation5 + $0x298] sm:$0xff]
        %v453 = vld [vmem:[#allocation5 + $0x2a0] sm:$0xff]
        %v454 = vld [vmem:[#allocation5 + $0x2a8] sm:$0xff]
        %v455 = vld [vmem:[#allocation5 + $0x2b0] sm:$0xff]
        %v456 = vld [vmem:[#allocation5 + $0x2b8] sm:$0xff]
        %v457 = vld [vmem:[#allocation5 + $0x2c0] sm:$0xff]
        %v458 = vld [vmem:[#allocation5 + $0x2c8] sm:$0xff]
        %v459 = vld [vmem:[#allocation5 + $0x2d0] sm:$0xff]
        %v460 = vld [vmem:[#allocation5 + $0x2d8] sm:$0xff]
        %v461 = vld [vmem:[#allocation5 + $0x2e0] sm:$0xff]
        %v462 = vld [vmem:[#allocation5 + $0x2e8] sm:$0xff]
        %v463 = vld [vmem:[#allocation5 + $0x2f0] sm:$0xff]
        %v464 = vld [vmem:[#allocation5 + $0x2f8] sm:$0xff]
        %v465 = vld [vmem:[#allocation7] sm:$0x3f]
        %v467 = vperm.slane %v465, 0
        %v468 = vperm.slane %v465, 1
        %v469 = vperm.slane %v465, 2
        %v470 = vperm.slane %v465, 3
        %v471 = vperm.slane %v465, 4
        %v472 = vperm.slane %v465, 5
        %v575 = vunpack.c.l.b16 %v369
        %v576 = vunpack.c.h.b16 %v369
        %v577 = vunpack.c.l.b16 %v370
        %v578 = vunpack.c.h.b16 %v370
        %v579 = vunpack.c.l.b16 %v371
        %v580 = vunpack.c.h.b16 %v371
        %v581 = vunpack.c.l.b16 %v372
        %v582 = vunpack.c.h.b16 %v372
        %v583 = vunpack.c.l.b16 %v373
        %v584 = vunpack.c.h.b16 %v373
        %v585 = vunpack.c.l.b16 %v374
        %v586 = vunpack.c.h.b16 %v374
        %v587 = vunpack.c.l.b16 %v375
        %v588 = vunpack.c.h.b16 %v375
        %v589 = vunpack.c.l.b16 %v376
        %v590 = vunpack.c.h.b16 %v376
        %v591 = vunpack.c.l.b16 %v377
        %v592 = vunpack.c.h.b16 %v377
        %v593 = vunpack.c.l.b16 %v378
        %v594 = vunpack.c.h.b16 %v378
        %v595 = vunpack.c.l.b16 %v379
        %v596 = vunpack.c.h.b16 %v379
        %v597 = vunpack.c.l.b16 %v380
        %v598 = vunpack.c.h.b16 %v380
        %v599 = vunpack.c.l.b16 %v381
        %v600 = vunpack.c.h.b16 %v381
        %v601 = vunpack.c.l.b16 %v382
        %v602 = vunpack.c.h.b16 %v382
        %v603 = vunpack.c.l.b16 %v383
        %v604 = vunpack.c.h.b16 %v383
        %v605 = vunpack.c.l.b16 %v384
        %v606 = vunpack.c.h.b16 %v384
        %v607 = vunpack.c.l.b16 %v385
        %v608 = vunpack.c.h.b16 %v385
        %v609 = vunpack.c.l.b16 %v386
        %v610 = vunpack.c.h.b16 %v386
        %v611 = vunpack.c.l.b16 %v387
        %v612 = vunpack.c.h.b16 %v387
        %v613 = vunpack.c.l.b16 %v388
        %v614 = vunpack.c.h.b16 %v388
        %v615 = vunpack.c.l.b16 %v389
        %v616 = vunpack.c.h.b16 %v389
        %v617 = vunpack.c.l.b16 %v390
        %v618 = vunpack.c.h.b16 %v390
        %v619 = vunpack.c.l.b16 %v391
        %v620 = vunpack.c.h.b16 %v391
        %v621 = vunpack.c.l.b16 %v392
        %v622 = vunpack.c.h.b16 %v392
        %v623 = vunpack.c.l.b16 %v393
        %v624 = vunpack.c.h.b16 %v393
        %v625 = vunpack.c.l.b16 %v394
        %v626 = vunpack.c.h.b16 %v394
        %v627 = vunpack.c.l.b16 %v395
        %v628 = vunpack.c.h.b16 %v395
        %v629 = vunpack.c.l.b16 %v396
        %v630 = vunpack.c.h.b16 %v396
        %v631 = vunpack.c.l.b16 %v397
        %v632 = vunpack.c.h.b16 %v397
        %v633 = vunpack.c.l.b16 %v398
        %v634 = vunpack.c.h.b16 %v398
        %v635 = vunpack.c.l.b16 %v399
        %v636 = vunpack.c.h.b16 %v399
        %v637 = vunpack.c.l.b16 %v400
        %v638 = vunpack.c.h.b16 %v400
        %v639 = vunpack.c.l.b16 %v401
        %v640 = vunpack.c.h.b16 %v401
        %v641 = vunpack.c.l.b16 %v402
        %v642 = vunpack.c.h.b16 %v402
        %v643 = vunpack.c.l.b16 %v403
        %v644 = vunpack.c.h.b16 %v403
        %v645 = vunpack.c.l.b16 %v404
        %v646 = vunpack.c.h.b16 %v404
        %v647 = vunpack.c.l.b16 %v405
        %v648 = vunpack.c.h.b16 %v405
        %v649 = vunpack.c.l.b16 %v406
        %v650 = vunpack.c.h.b16 %v406
        %v651 = vunpack.c.l.b16 %v407
        %v652 = vunpack.c.h.b16 %v407
        %v653 = vunpack.c.l.b16 %v408
        %v654 = vunpack.c.h.b16 %v408
        %v655 = vunpack.c.l.b16 %v409
        %v656 = vunpack.c.h.b16 %v409
        %v657 = vunpack.c.l.b16 %v410
        %v658 = vunpack.c.h.b16 %v410
        %v659 = vunpack.c.l.b16 %v411
        %v660 = vunpack.c.h.b16 %v411
        %v661 = vunpack.c.l.b16 %v412
        %v662 = vunpack.c.h.b16 %v412
        %v663 = vunpack.c.l.b16 %v413
        %v664 = vunpack.c.h.b16 %v413
        %v665 = vunpack.c.l.b16 %v414
        %v666 = vunpack.c.h.b16 %v414
        %v667 = vunpack.c.l.b16 %v415
        %v668 = vunpack.c.h.b16 %v415
        %v669 = vunpack.c.l.b16 %v416
        %v670 = vunpack.c.h.b16 %v416
        %v671 = vunpack.c.l.b16 %v417
        %v672 = vunpack.c.h.b16 %v417
        %v673 = vunpack.c.l.b16 %v418
        %v674 = vunpack.c.h.b16 %v418
        %v675 = vunpack.c.l.b16 %v419
        %v676 = vunpack.c.h.b16 %v419
        %v677 = vunpack.c.l.b16 %v420
        %v678 = vunpack.c.h.b16 %v420
        %v679 = vunpack.c.l.b16 %v421
        %v680 = vunpack.c.h.b16 %v421
        %v681 = vunpack.c.l.b16 %v422
        %v682 = vunpack.c.h.b16 %v422
        %v683 = vunpack.c.l.b16 %v423
        %v684 = vunpack.c.h.b16 %v423
        %v685 = vunpack.c.l.b16 %v424
        %v686 = vunpack.c.h.b16 %v424
        %v687 = vunpack.c.l.b16 %v425
        %v688 = vunpack.c.h.b16 %v425
        %v689 = vunpack.c.l.b16 %v426
        %v690 = vunpack.c.h.b16 %v426
        %v691 = vunpack.c.l.b16 %v427
        %v692 = vunpack.c.h.b16 %v427
        %v693 = vunpack.c.l.b16 %v428
        %v694 = vunpack.c.h.b16 %v428
        %v695 = vunpack.c.l.b16 %v429
        %v696 = vunpack.c.h.b16 %v429
        %v697 = vunpack.c.l.b16 %v430
        %v698 = vunpack.c.h.b16 %v430
        %v699 = vunpack.c.l.b16 %v431
        %v700 = vunpack.c.h.b16 %v431
        %v701 = vunpack.c.l.b16 %v432
        %v702 = vunpack.c.h.b16 %v432
        %v703 = vunpack.c.l.b16 %v433
        %v704 = vunpack.c.h.b16 %v433
        %v705 = vunpack.c.l.b16 %v434
        %v706 = vunpack.c.h.b16 %v434
        %v707 = vunpack.c.l.b16 %v435
        %v708 = vunpack.c.h.b16 %v435
        %v709 = vunpack.c.l.b16 %v436
        %v710 = vunpack.c.h.b16 %v436
        %v711 = vunpack.c.l.b16 %v437
        %v712 = vunpack.c.h.b16 %v437
        %v713 = vunpack.c.l.b16 %v438
        %v714 = vunpack.c.h.b16 %v438
        %v715 = vunpack.c.l.b16 %v439
        %v716 = vunpack.c.h.b16 %v439
        %v717 = vunpack.c.l.b16 %v440
        %v718 = vunpack.c.h.b16 %v440
        %v719 = vunpack.c.l.b16 %v441
        %v720 = vunpack.c.h.b16 %v441
        %v721 = vunpack.c.l.b16 %v442
        %v722 = vunpack.c.h.b16 %v442
        %v723 = vunpack.c.l.b16 %v443
        %v724 = vunpack.c.h.b16 %v443
        %v725 = vunpack.c.l.b16 %v444
        %v726 = vunpack.c.h.b16 %v444
        %v727 = vunpack.c.l.b16 %v445
        %v728 = vunpack.c.h.b16 %v445
        %v729 = vunpack.c.l.b16 %v446
        %v730 = vunpack.c.h.b16 %v446
        %v731 = vunpack.c.l.b16 %v447
        %v732 = vunpack.c.h.b16 %v447
        %v733 = vunpack.c.l.b16 %v448
        %v734 = vunpack.c.h.b16 %v448
        %v735 = vunpack.c.l.b16 %v449
        %v736 = vunpack.c.h.b16 %v449
        %v737 = vunpack.c.l.b16 %v450
        %v738 = vunpack.c.h.b16 %v450
        %v739 = vunpack.c.l.b16 %v451
        %v740 = vunpack.c.h.b16 %v451
        %v741 = vunpack.c.l.b16 %v452
        %v742 = vunpack.c.h.b16 %v452
        %v743 = vunpack.c.l.b16 %v453
        %v744 = vunpack.c.h.b16 %v453
        %v745 = vunpack.c.l.b16 %v454
        %v746 = vunpack.c.h.b16 %v454
        %v747 = vunpack.c.l.b16 %v455
        %v748 = vunpack.c.h.b16 %v455
        %v749 = vunpack.c.l.b16 %v456
        %v750 = vunpack.c.h.b16 %v456
        %v751 = vunpack.c.l.b16 %v457
        %v752 = vunpack.c.h.b16 %v457
        %v753 = vunpack.c.l.b16 %v458
        %v754 = vunpack.c.h.b16 %v458
        %v755 = vunpack.c.l.b16 %v459
        %v756 = vunpack.c.h.b16 %v459
        %v757 = vunpack.c.l.b16 %v460
        %v758 = vunpack.c.h.b16 %v460
        %v759 = vunpack.c.l.b16 %v461
        %v760 = vunpack.c.h.b16 %v461
        %v761 = vunpack.c.l.b16 %v462
        %v762 = vunpack.c.h.b16 %v462
        %v763 = vunpack.c.l.b16 %v463
        %v764 = vunpack.c.h.b16 %v463
        %v765 = vunpack.c.l.b16 %v464
        %v766 = vunpack.c.h.b16 %v464
        %v767 = vpack.c.b16 %v581, %v575
        %v768 = vpack.c.b16 %v582, %v576
        %v769 = vpack.c.b16 %v583, %v577
        %v770 = vpack.c.b16 %v584, %v578
        %v771 = vpack.c.b16 %v585, %v579
        %v772 = vpack.c.b16 %v586, %v580
        %v773 = vpack.c.b16 %v593, %v587
        %v774 = vpack.c.b16 %v594, %v588
        %v775 = vpack.c.b16 %v595, %v589
        %v776 = vpack.c.b16 %v596, %v590
        %v777 = vpack.c.b16 %v597, %v591
        %v778 = vpack.c.b16 %v598, %v592
        %v779 = vpack.c.b16 %v605, %v599
        %v780 = vpack.c.b16 %v606, %v600
        %v781 = vpack.c.b16 %v607, %v601
        %v782 = vpack.c.b16 %v608, %v602
        %v783 = vpack.c.b16 %v609, %v603
        %v784 = vpack.c.b16 %v610, %v604
        %v785 = vpack.c.b16 %v617, %v611
        %v786 = vpack.c.b16 %v618, %v612
        %v787 = vpack.c.b16 %v619, %v613
        %v788 = vpack.c.b16 %v620, %v614
        %v789 = vpack.c.b16 %v621, %v615
        %v790 = vpack.c.b16 %v622, %v616
        %v791 = vpack.c.b16 %v629, %v623
        %v792 = vpack.c.b16 %v630, %v624
        %v793 = vpack.c.b16 %v631, %v625
        %v794 = vpack.c.b16 %v632, %v626
        %v795 = vpack.c.b16 %v633, %v627
        %v796 = vpack.c.b16 %v634, %v628
        %v797 = vpack.c.b16 %v641, %v635
        %v798 = vpack.c.b16 %v642, %v636
        %v799 = vpack.c.b16 %v643, %v637
        %v800 = vpack.c.b16 %v644, %v638
        %v801 = vpack.c.b16 %v645, %v639
        %v802 = vpack.c.b16 %v646, %v640
        %v803 = vpack.c.b16 %v653, %v647
        %v804 = vpack.c.b16 %v654, %v648
        %v805 = vpack.c.b16 %v655, %v649
        %v806 = vpack.c.b16 %v656, %v650
        %v807 = vpack.c.b16 %v657, %v651
        %v808 = vpack.c.b16 %v658, %v652
        %v809 = vpack.c.b16 %v665, %v659
        %v810 = vpack.c.b16 %v666, %v660
        %v811 = vpack.c.b16 %v667, %v661
        %v812 = vpack.c.b16 %v668, %v662
        %v813 = vpack.c.b16 %v669, %v663
        %v814 = vpack.c.b16 %v670, %v664
        %v815 = vpack.c.b16 %v677, %v671
        %v816 = vpack.c.b16 %v678, %v672
        %v817 = vpack.c.b16 %v679, %v673
        %v818 = vpack.c.b16 %v680, %v674
        %v819 = vpack.c.b16 %v681, %v675
        %v820 = vpack.c.b16 %v682, %v676
        %v821 = vpack.c.b16 %v689, %v683
        %v822 = vpack.c.b16 %v690, %v684
        %v823 = vpack.c.b16 %v691, %v685
        %v824 = vpack.c.b16 %v692, %v686
        %v825 = vpack.c.b16 %v693, %v687
        %v826 = vpack.c.b16 %v694, %v688
        %v827 = vpack.c.b16 %v701, %v695
        %v828 = vpack.c.b16 %v702, %v696
        %v829 = vpack.c.b16 %v703, %v697
        %v830 = vpack.c.b16 %v704, %v698
        %v831 = vpack.c.b16 %v705, %v699
        %v832 = vpack.c.b16 %v706, %v700
        %v833 = vpack.c.b16 %v713, %v707
        %v834 = vpack.c.b16 %v714, %v708
        %v835 = vpack.c.b16 %v715, %v709
        %v836 = vpack.c.b16 %v716, %v710
        %v837 = vpack.c.b16 %v717, %v711
        %v838 = vpack.c.b16 %v718, %v712
        %v839 = vpack.c.b16 %v725, %v719
        %v840 = vpack.c.b16 %v726, %v720
        %v841 = vpack.c.b16 %v727, %v721
        %v842 = vpack.c.b16 %v728, %v722
        %v843 = vpack.c.b16 %v729, %v723
        %v844 = vpack.c.b16 %v730, %v724
        %v845 = vpack.c.b16 %v737, %v731
        %v846 = vpack.c.b16 %v738, %v732
        %v847 = vpack.c.b16 %v739, %v733
        %v848 = vpack.c.b16 %v740, %v734
        %v849 = vpack.c.b16 %v741, %v735
        %v850 = vpack.c.b16 %v742, %v736
        %v851 = vpack.c.b16 %v749, %v743
        %v852 = vpack.c.b16 %v750, %v744
        %v853 = vpack.c.b16 %v751, %v745
        %v854 = vpack.c.b16 %v752, %v746
        %v855 = vpack.c.b16 %v753, %v747
        %v856 = vpack.c.b16 %v754, %v748
        %v857 = vpack.c.b16 %v761, %v755
        %v858 = vpack.c.b16 %v762, %v756
        %v859 = vpack.c.b16 %v763, %v757
        %v860 = vpack.c.b16 %v764, %v758
        %v861 = vpack.c.b16 %v765, %v759
        %v862 = vpack.c.b16 %v766, %v760
        %959 = vmatpush.bf16.msra.mxu0 %v809
        %960 = vmatpush.bf16.msra.mxu0 %v803
        %961 = vmatpush.bf16.msra.mxu0 %v797
        %962 = vmatpush.bf16.msra.mxu0 %v791
        %963 = vmatpush.bf16.msra.mxu0 %v785
        %964 = vmatpush.bf16.msra.mxu0 %v779
        %965 = vmatpush.bf16.msra.mxu0 %v773
        %966 = vmatpush.bf16.msra.mxu0 %v767
        %967 = vmatmul.bf16.gmra.mxu0 %v353
        %v968 = vpop.f32.mrf.mxu0
        %v969 = vadd.f32 %v467, %v968
        %v970 = vpop.f32.mrf.mxu0
        %v971 = vadd.f32 %v467, %v970
        %972 = vmatmul.bf16.gmra.mxu0 %v355
        %v973 = vpop.f32.mrf.mxu0
        %v974 = vadd.f32 %v467, %v973
        %v975 = vpop.f32.mrf.mxu0
        %v976 = vadd.f32 %v467, %v975
        %977 = vmatmul.bf16.gmra.mxu0 %v357
        %v978 = vpop.f32.mrf.mxu0
        %v979 = vadd.f32 %v467, %v978
        %v980 = vpop.f32.mrf.mxu0
        %v981 = vadd.f32 %v467, %v980
        %982 = vmatmul.bf16.gmra.mxu0 %v359
        %v983 = vpop.f32.mrf.mxu0
        %v984 = vadd.f32 %v467, %v983
        %v985 = vpop.f32.mrf.mxu0
        %v986 = vadd.f32 %v467, %v985
        %987 = vmatmul.bf16.gmra.mxu0 %v361
        %v988 = vpop.f32.mrf.mxu0
        %v989 = vadd.f32 %v467, %v988
        %v990 = vpop.f32.mrf.mxu0
        %v991 = vadd.f32 %v467, %v990
        %992 = vmatmul.bf16.gmra.mxu0 %v363
        %v993 = vpop.f32.mrf.mxu0
        %v994 = vadd.f32 %v467, %v993
        %v995 = vpop.f32.mrf.mxu0
        %v996 = vadd.f32 %v467, %v995
        %997 = vmatmul.bf16.gmra.mxu0 %v365
        %v998 = vpop.f32.mrf.mxu0
        %v999 = vadd.f32 %v467, %v998
        %v1000 = vpop.f32.mrf.mxu0
        %v1001 = vadd.f32 %v467, %v1000
        %1002 = vmatmul.bf16.gmra.mxu0 %v367
        %v1003 = vpop.f32.mrf.mxu0
        %v1004 = vadd.f32 %v467, %v1003
        %v1005 = vpop.f32.mrf.mxu0
        %v1006 = vadd.f32 %v467, %v1005
        %1007 = vdwg.mxu0
        %1008 = vmatpush.bf16.msra.mxu0 %v857
        %1009 = vmatpush.bf16.msra.mxu0 %v851
        %1010 = vmatpush.bf16.msra.mxu0 %v845
        %1011 = vmatpush.bf16.msra.mxu0 %v839
        %1012 = vmatpush.bf16.msra.mxu0 %v833
        %1013 = vmatpush.bf16.msra.mxu0 %v827
        %1014 = vmatpush.bf16.msra.mxu0 %v821
        %1015 = vmatpush.bf16.msra.mxu0 %v815
        %1016 = vmatmul.bf16.gmra.mxu0 %v354
        %v1017 = vpop.f32.mrf.mxu0
        %v1018 = vadd.f32 %v969, %v1017
        %v1019 = vpop.f32.mrf.mxu0
        %v1020 = vadd.f32 %v971, %v1019
        %1021 = vmatmul.bf16.gmra.mxu0 %v356
        %v1022 = vpop.f32.mrf.mxu0
        %v1023 = vadd.f32 %v974, %v1022
        %v1024 = vpop.f32.mrf.mxu0
        %v1025 = vadd.f32 %v976, %v1024
        %1026 = vmatmul.bf16.gmra.mxu0 %v358
        %v1027 = vpop.f32.mrf.mxu0
        %v1028 = vadd.f32 %v979, %v1027
        %v1029 = vpop.f32.mrf.mxu0
        %v1030 = vadd.f32 %v981, %v1029
        %1031 = vmatmul.bf16.gmra.mxu0 %v360
        %v1032 = vpop.f32.mrf.mxu0
        %v1033 = vadd.f32 %v984, %v1032
        %v1034 = vpop.f32.mrf.mxu0
        %v1035 = vadd.f32 %v986, %v1034
        %1036 = vmatmul.bf16.gmra.mxu0 %v362
        %v1037 = vpop.f32.mrf.mxu0
        %v1038 = vadd.f32 %v989, %v1037
        %v1039 = vpop.f32.mrf.mxu0
        %v1040 = vadd.f32 %v991, %v1039
        %1041 = vmatmul.bf16.gmra.mxu0 %v364
        %v1042 = vpop.f32.mrf.mxu0
        %v1043 = vadd.f32 %v994, %v1042
        %v1044 = vpop.f32.mrf.mxu0
        %v1045 = vadd.f32 %v996, %v1044
        %1046 = vmatmul.bf16.gmra.mxu0 %v366
        %v1047 = vpop.f32.mrf.mxu0
        %v1048 = vadd.f32 %v999, %v1047
        %v1049 = vpop.f32.mrf.mxu0
        %v1050 = vadd.f32 %v1001, %v1049
        %1051 = vmatmul.bf16.gmra.mxu0 %v368
        %v1052 = vpop.f32.mrf.mxu0
        %v1053 = vadd.f32 %v1004, %v1052
        %v1054 = vpop.f32.mrf.mxu0
        %v1055 = vadd.f32 %v1006, %v1054
        %1056 = vdwg.mxu0
        %1057 = vmatpush.bf16.msra.mxu0 %v810
        %1058 = vmatpush.bf16.msra.mxu0 %v804
        %1059 = vmatpush.bf16.msra.mxu0 %v798
        %1060 = vmatpush.bf16.msra.mxu0 %v792
        %1061 = vmatpush.bf16.msra.mxu0 %v786
        %1062 = vmatpush.bf16.msra.mxu0 %v780
        %1063 = vmatpush.bf16.msra.mxu0 %v774
        %1064 = vmatpush.bf16.msra.mxu0 %v768
        %1065 = vmatmul.bf16.gmra.mxu0 %v353
        %v1066 = vpop.f32.mrf.mxu0
        %v1067 = vadd.f32 %v468, %v1066
        %v1068 = vpop.f32.mrf.mxu0
        %v1069 = vadd.f32 %v468, %v1068
        %1070 = vmatmul.bf16.gmra.mxu0 %v355
        %v1071 = vpop.f32.mrf.mxu0
        %v1072 = vadd.f32 %v468, %v1071
        %v1073 = vpop.f32.mrf.mxu0
        %v1074 = vadd.f32 %v468, %v1073
        %1075 = vmatmul.bf16.gmra.mxu0 %v357
        %v1076 = vpop.f32.mrf.mxu0
        %v1077 = vadd.f32 %v468, %v1076
        %v1078 = vpop.f32.mrf.mxu0
        %v1079 = vadd.f32 %v468, %v1078
        %1080 = vmatmul.bf16.gmra.mxu0 %v359
        %v1081 = vpop.f32.mrf.mxu0
        %v1082 = vadd.f32 %v468, %v1081
        %v1083 = vpop.f32.mrf.mxu0
        %v1084 = vadd.f32 %v468, %v1083
        %1085 = vmatmul.bf16.gmra.mxu0 %v361
        %v1086 = vpop.f32.mrf.mxu0
        %v1087 = vadd.f32 %v468, %v1086
        %v1088 = vpop.f32.mrf.mxu0
        %v1089 = vadd.f32 %v468, %v1088
        %1090 = vmatmul.bf16.gmra.mxu0 %v363
        %v1091 = vpop.f32.mrf.mxu0
        %v1092 = vadd.f32 %v468, %v1091
        %v1093 = vpop.f32.mrf.mxu0
        %v1094 = vadd.f32 %v468, %v1093
        %1095 = vmatmul.bf16.gmra.mxu0 %v365
        %v1096 = vpop.f32.mrf.mxu0
        %v1097 = vadd.f32 %v468, %v1096
        %v1098 = vpop.f32.mrf.mxu0
        %v1099 = vadd.f32 %v468, %v1098
        %1100 = vmatmul.bf16.gmra.mxu0 %v367
        %v1101 = vpop.f32.mrf.mxu0
        %v1102 = vadd.f32 %v468, %v1101
        %v1103 = vpop.f32.mrf.mxu0
        %v1104 = vadd.f32 %v468, %v1103
        %1105 = vdwg.mxu0
        %1106 = vmatpush.bf16.msra.mxu0 %v858
        %1107 = vmatpush.bf16.msra.mxu0 %v852
        %1108 = vmatpush.bf16.msra.mxu0 %v846
        %1109 = vmatpush.bf16.msra.mxu0 %v840
        %1110 = vmatpush.bf16.msra.mxu0 %v834
        %1111 = vmatpush.bf16.msra.mxu0 %v828
        %1112 = vmatpush.bf16.msra.mxu0 %v822
        %1113 = vmatpush.bf16.msra.mxu0 %v816
        %1114 = vmatmul.bf16.gmra.mxu0 %v354
        %v1115 = vpop.f32.mrf.mxu0
        %v1116 = vadd.f32 %v1067, %v1115
        %v1117 = vpop.f32.mrf.mxu0
        %v1118 = vadd.f32 %v1069, %v1117
        %1119 = vmatmul.bf16.gmra.mxu0 %v356
        %v1120 = vpop.f32.mrf.mxu0
        %v1121 = vadd.f32 %v1072, %v1120
        %v1122 = vpop.f32.mrf.mxu0
        %v1123 = vadd.f32 %v1074, %v1122
        %1124 = vmatmul.bf16.gmra.mxu0 %v358
        %v1125 = vpop.f32.mrf.mxu0
        %v1126 = vadd.f32 %v1077, %v1125
        %v1127 = vpop.f32.mrf.mxu0
        %v1128 = vadd.f32 %v1079, %v1127
        %1129 = vmatmul.bf16.gmra.mxu0 %v360
        %v1130 = vpop.f32.mrf.mxu0
        %v1131 = vadd.f32 %v1082, %v1130
        %v1132 = vpop.f32.mrf.mxu0
        %v1133 = vadd.f32 %v1084, %v1132
        %1134 = vmatmul.bf16.gmra.mxu0 %v362
        %v1135 = vpop.f32.mrf.mxu0
        %v1136 = vadd.f32 %v1087, %v1135
        %v1137 = vpop.f32.mrf.mxu0
        %v1138 = vadd.f32 %v1089, %v1137
        %1139 = vmatmul.bf16.gmra.mxu0 %v364
        %v1140 = vpop.f32.mrf.mxu0
        %v1141 = vadd.f32 %v1092, %v1140
        %v1142 = vpop.f32.mrf.mxu0
        %v1143 = vadd.f32 %v1094, %v1142
        %1144 = vmatmul.bf16.gmra.mxu0 %v366
        %v1145 = vpop.f32.mrf.mxu0
        %v1146 = vadd.f32 %v1097, %v1145
        %v1147 = vpop.f32.mrf.mxu0
        %v1148 = vadd.f32 %v1099, %v1147
        %1149 = vmatmul.bf16.gmra.mxu0 %v368
        %v1150 = vpop.f32.mrf.mxu0
        %v1151 = vadd.f32 %v1102, %v1150
        %v1152 = vpop.f32.mrf.mxu0
        %v1153 = vadd.f32 %v1104, %v1152
        %1154 = vdwg.mxu0
        %1155 = vmatpush.bf16.msra.mxu0 %v811
        %1156 = vmatpush.bf16.msra.mxu0 %v805
        %1157 = vmatpush.bf16.msra.mxu0 %v799
        %1158 = vmatpush.bf16.msra.mxu0 %v793
        %1159 = vmatpush.bf16.msra.mxu0 %v787
        %1160 = vmatpush.bf16.msra.mxu0 %v781
        %1161 = vmatpush.bf16.msra.mxu0 %v775
        %1162 = vmatpush.bf16.msra.mxu0 %v769
        %1163 = vmatmul.bf16.gmra.mxu0 %v353
        %v1164 = vpop.f32.mrf.mxu0
        %v1165 = vadd.f32 %v469, %v1164
        %v1166 = vpop.f32.mrf.mxu0
        %v1167 = vadd.f32 %v469, %v1166
        %1168 = vmatmul.bf16.gmra.mxu0 %v355
        %v1169 = vpop.f32.mrf.mxu0
        %v1170 = vadd.f32 %v469, %v1169
        %v1171 = vpop.f32.mrf.mxu0
        %v1172 = vadd.f32 %v469, %v1171
        %1173 = vmatmul.bf16.gmra.mxu0 %v357
        %v1174 = vpop.f32.mrf.mxu0
        %v1175 = vadd.f32 %v469, %v1174
        %v1176 = vpop.f32.mrf.mxu0
        %v1177 = vadd.f32 %v469, %v1176
        %1178 = vmatmul.bf16.gmra.mxu0 %v359
        %v1179 = vpop.f32.mrf.mxu0
        %v1180 = vadd.f32 %v469, %v1179
        %v1181 = vpop.f32.mrf.mxu0
        %v1182 = vadd.f32 %v469, %v1181
        %1183 = vmatmul.bf16.gmra.mxu0 %v361
        %v1184 = vpop.f32.mrf.mxu0
        %v1185 = vadd.f32 %v469, %v1184
        %v1186 = vpop.f32.mrf.mxu0
        %v1187 = vadd.f32 %v469, %v1186
        %1188 = vmatmul.bf16.gmra.mxu0 %v363
        %v1189 = vpop.f32.mrf.mxu0
        %v1190 = vadd.f32 %v469, %v1189
        %v1191 = vpop.f32.mrf.mxu0
        %v1192 = vadd.f32 %v469, %v1191
        %1193 = vmatmul.bf16.gmra.mxu0 %v365
        %v1194 = vpop.f32.mrf.mxu0
        %v1195 = vadd.f32 %v469, %v1194
        %v1196 = vpop.f32.mrf.mxu0
        %v1197 = vadd.f32 %v469, %v1196
        %1198 = vmatmul.bf16.gmra.mxu0 %v367
        %v1199 = vpop.f32.mrf.mxu0
        %v1200 = vadd.f32 %v469, %v1199
        %v1201 = vpop.f32.mrf.mxu0
        %v1202 = vadd.f32 %v469, %v1201
        %1203 = vdwg.mxu0
        %1204 = vmatpush.bf16.msra.mxu0 %v859
        %1205 = vmatpush.bf16.msra.mxu0 %v853
        %1206 = vmatpush.bf16.msra.mxu0 %v847
        %1207 = vmatpush.bf16.msra.mxu0 %v841
        %1208 = vmatpush.bf16.msra.mxu0 %v835
        %1209 = vmatpush.bf16.msra.mxu0 %v829
        %1210 = vmatpush.bf16.msra.mxu0 %v823
        %1211 = vmatpush.bf16.msra.mxu0 %v817
        %1212 = vmatmul.bf16.gmra.mxu0 %v354
        %v1213 = vpop.f32.mrf.mxu0
        %v1214 = vadd.f32 %v1165, %v1213
        %v1215 = vpop.f32.mrf.mxu0
        %v1216 = vadd.f32 %v1167, %v1215
        %1217 = vmatmul.bf16.gmra.mxu0 %v356
        %v1218 = vpop.f32.mrf.mxu0
        %v1219 = vadd.f32 %v1170, %v1218
        %v1220 = vpop.f32.mrf.mxu0
        %v1221 = vadd.f32 %v1172, %v1220
        %1222 = vmatmul.bf16.gmra.mxu0 %v358
        %v1223 = vpop.f32.mrf.mxu0
        %v1224 = vadd.f32 %v1175, %v1223
        %v1225 = vpop.f32.mrf.mxu0
        %v1226 = vadd.f32 %v1177, %v1225
        %1227 = vmatmul.bf16.gmra.mxu0 %v360
        %v1228 = vpop.f32.mrf.mxu0
        %v1229 = vadd.f32 %v1180, %v1228
        %v1230 = vpop.f32.mrf.mxu0
        %v1231 = vadd.f32 %v1182, %v1230
        %1232 = vmatmul.bf16.gmra.mxu0 %v362
        %v1233 = vpop.f32.mrf.mxu0
        %v1234 = vadd.f32 %v1185, %v1233
        %v1235 = vpop.f32.mrf.mxu0
        %v1236 = vadd.f32 %v1187, %v1235
        %1237 = vmatmul.bf16.gmra.mxu0 %v364
        %v1238 = vpop.f32.mrf.mxu0
        %v1239 = vadd.f32 %v1190, %v1238
        %v1240 = vpop.f32.mrf.mxu0
        %v1241 = vadd.f32 %v1192, %v1240
        %1242 = vmatmul.bf16.gmra.mxu0 %v366
        %v1243 = vpop.f32.mrf.mxu0
        %v1244 = vadd.f32 %v1195, %v1243
        %v1245 = vpop.f32.mrf.mxu0
        %v1246 = vadd.f32 %v1197, %v1245
        %1247 = vmatmul.bf16.gmra.mxu0 %v368
        %v1248 = vpop.f32.mrf.mxu0
        %v1249 = vadd.f32 %v1200, %v1248
        %v1250 = vpop.f32.mrf.mxu0
        %v1251 = vadd.f32 %v1202, %v1250
        %1252 = vdwg.mxu0
        %1253 = vmatpush.bf16.msra.mxu0 %v812
        %1254 = vmatpush.bf16.msra.mxu0 %v806
        %1255 = vmatpush.bf16.msra.mxu0 %v800
        %1256 = vmatpush.bf16.msra.mxu0 %v794
        %1257 = vmatpush.bf16.msra.mxu0 %v788
        %1258 = vmatpush.bf16.msra.mxu0 %v782
        %1259 = vmatpush.bf16.msra.mxu0 %v776
        %1260 = vmatpush.bf16.msra.mxu0 %v770
        %1261 = vmatmul.bf16.gmra.mxu0 %v353
        %v1262 = vpop.f32.mrf.mxu0
        %v1263 = vadd.f32 %v470, %v1262
        %v1264 = vpop.f32.mrf.mxu0
        %v1265 = vadd.f32 %v470, %v1264
        %1266 = vmatmul.bf16.gmra.mxu0 %v355
        %v1267 = vpop.f32.mrf.mxu0
        %v1268 = vadd.f32 %v470, %v1267
        %v1269 = vpop.f32.mrf.mxu0
        %v1270 = vadd.f32 %v470, %v1269
        %1271 = vmatmul.bf16.gmra.mxu0 %v357
        %v1272 = vpop.f32.mrf.mxu0
        %v1273 = vadd.f32 %v470, %v1272
        %v1274 = vpop.f32.mrf.mxu0
        %v1275 = vadd.f32 %v470, %v1274
        %1276 = vmatmul.bf16.gmra.mxu0 %v359
        %v1277 = vpop.f32.mrf.mxu0
        %v1278 = vadd.f32 %v470, %v1277
        %v1279 = vpop.f32.mrf.mxu0
        %v1280 = vadd.f32 %v470, %v1279
        %1281 = vmatmul.bf16.gmra.mxu0 %v361
        %v1282 = vpop.f32.mrf.mxu0
        %v1283 = vadd.f32 %v470, %v1282
        %v1284 = vpop.f32.mrf.mxu0
        %v1285 = vadd.f32 %v470, %v1284
        %1286 = vmatmul.bf16.gmra.mxu0 %v363
        %v1287 = vpop.f32.mrf.mxu0
        %v1288 = vadd.f32 %v470, %v1287
        %v1289 = vpop.f32.mrf.mxu0
        %v1290 = vadd.f32 %v470, %v1289
        %1291 = vmatmul.bf16.gmra.mxu0 %v365
        %v1292 = vpop.f32.mrf.mxu0
        %v1293 = vadd.f32 %v470, %v1292
        %v1294 = vpop.f32.mrf.mxu0
        %v1295 = vadd.f32 %v470, %v1294
        %1296 = vmatmul.bf16.gmra.mxu0 %v367
        %v1297 = vpop.f32.mrf.mxu0
        %v1298 = vadd.f32 %v470, %v1297
        %v1299 = vpop.f32.mrf.mxu0
        %v1300 = vadd.f32 %v470, %v1299
        %1301 = vdwg.mxu0
        %1302 = vmatpush.bf16.msra.mxu0 %v860
        %1303 = vmatpush.bf16.msra.mxu0 %v854
        %1304 = vmatpush.bf16.msra.mxu0 %v848
        %1305 = vmatpush.bf16.msra.mxu0 %v842
        %1306 = vmatpush.bf16.msra.mxu0 %v836
        %1307 = vmatpush.bf16.msra.mxu0 %v830
        %1308 = vmatpush.bf16.msra.mxu0 %v824
        %1309 = vmatpush.bf16.msra.mxu0 %v818
        %1310 = vmatmul.bf16.gmra.mxu0 %v354
        %v1311 = vpop.f32.mrf.mxu0
        %v1312 = vadd.f32 %v1263, %v1311
        %v1313 = vpop.f32.mrf.mxu0
        %v1314 = vadd.f32 %v1265, %v1313
        %1315 = vmatmul.bf16.gmra.mxu0 %v356
        %v1316 = vpop.f32.mrf.mxu0
        %v1317 = vadd.f32 %v1268, %v1316
        %v1318 = vpop.f32.mrf.mxu0
        %v1319 = vadd.f32 %v1270, %v1318
        %1320 = vmatmul.bf16.gmra.mxu0 %v358
        %v1321 = vpop.f32.mrf.mxu0
        %v1322 = vadd.f32 %v1273, %v1321
        %v1323 = vpop.f32.mrf.mxu0
        %v1324 = vadd.f32 %v1275, %v1323
        %1325 = vmatmul.bf16.gmra.mxu0 %v360
        %v1326 = vpop.f32.mrf.mxu0
        %v1327 = vadd.f32 %v1278, %v1326
        %v1328 = vpop.f32.mrf.mxu0
        %v1329 = vadd.f32 %v1280, %v1328
        %1330 = vmatmul.bf16.gmra.mxu0 %v362
        %v1331 = vpop.f32.mrf.mxu0
        %v1332 = vadd.f32 %v1283, %v1331
        %v1333 = vpop.f32.mrf.mxu0
        %v1334 = vadd.f32 %v1285, %v1333
        %1335 = vmatmul.bf16.gmra.mxu0 %v364
        %v1336 = vpop.f32.mrf.mxu0
        %v1337 = vadd.f32 %v1288, %v1336
        %v1338 = vpop.f32.mrf.mxu0
        %v1339 = vadd.f32 %v1290, %v1338
        %1340 = vmatmul.bf16.gmra.mxu0 %v366
        %v1341 = vpop.f32.mrf.mxu0
        %v1342 = vadd.f32 %v1293, %v1341
        %v1343 = vpop.f32.mrf.mxu0
        %v1344 = vadd.f32 %v1295, %v1343
        %1345 = vmatmul.bf16.gmra.mxu0 %v368
        %v1346 = vpop.f32.mrf.mxu0
        %v1347 = vadd.f32 %v1298, %v1346
        %v1348 = vpop.f32.mrf.mxu0
        %v1349 = vadd.f32 %v1300, %v1348
        %1350 = vdwg.mxu0
        %1351 = vmatpush.bf16.msra.mxu0 %v813
        %1352 = vmatpush.bf16.msra.mxu0 %v807
        %1353 = vmatpush.bf16.msra.mxu0 %v801
        %1354 = vmatpush.bf16.msra.mxu0 %v795
        %1355 = vmatpush.bf16.msra.mxu0 %v789
        %1356 = vmatpush.bf16.msra.mxu0 %v783
        %1357 = vmatpush.bf16.msra.mxu0 %v777
        %1358 = vmatpush.bf16.msra.mxu0 %v771
        %1359 = vmatmul.bf16.gmra.mxu0 %v353
        %v1360 = vpop.f32.mrf.mxu0
        %v1361 = vadd.f32 %v471, %v1360
        %v1362 = vpop.f32.mrf.mxu0
        %v1363 = vadd.f32 %v471, %v1362
        %1364 = vmatmul.bf16.gmra.mxu0 %v355
        %v1365 = vpop.f32.mrf.mxu0
        %v1366 = vadd.f32 %v471, %v1365
        %v1367 = vpop.f32.mrf.mxu0
        %v1368 = vadd.f32 %v471, %v1367
        %1369 = vmatmul.bf16.gmra.mxu0 %v357
        %v1370 = vpop.f32.mrf.mxu0
        %v1371 = vadd.f32 %v471, %v1370
        %v1372 = vpop.f32.mrf.mxu0
        %v1373 = vadd.f32 %v471, %v1372
        %1374 = vmatmul.bf16.gmra.mxu0 %v359
        %v1375 = vpop.f32.mrf.mxu0
        %v1376 = vadd.f32 %v471, %v1375
        %v1377 = vpop.f32.mrf.mxu0
        %v1378 = vadd.f32 %v471, %v1377
        %1379 = vmatmul.bf16.gmra.mxu0 %v361
        %v1380 = vpop.f32.mrf.mxu0
        %v1381 = vadd.f32 %v471, %v1380
        %v1382 = vpop.f32.mrf.mxu0
        %v1383 = vadd.f32 %v471, %v1382
        %1384 = vmatmul.bf16.gmra.mxu0 %v363
        %v1385 = vpop.f32.mrf.mxu0
        %v1386 = vadd.f32 %v471, %v1385
        %v1387 = vpop.f32.mrf.mxu0
        %v1388 = vadd.f32 %v471, %v1387
        %1389 = vmatmul.bf16.gmra.mxu0 %v365
        %v1390 = vpop.f32.mrf.mxu0
        %v1391 = vadd.f32 %v471, %v1390
        %v1392 = vpop.f32.mrf.mxu0
        %v1393 = vadd.f32 %v471, %v1392
        %1394 = vmatmul.bf16.gmra.mxu0 %v367
        %v1395 = vpop.f32.mrf.mxu0
        %v1396 = vadd.f32 %v471, %v1395
        %v1397 = vpop.f32.mrf.mxu0
        %v1398 = vadd.f32 %v471, %v1397
        %1399 = vdwg.mxu0
        %1400 = vmatpush.bf16.msra.mxu0 %v861
        %1401 = vmatpush.bf16.msra.mxu0 %v855
        %1402 = vmatpush.bf16.msra.mxu0 %v849
        %1403 = vmatpush.bf16.msra.mxu0 %v843
        %1404 = vmatpush.bf16.msra.mxu0 %v837
        %1405 = vmatpush.bf16.msra.mxu0 %v831
        %1406 = vmatpush.bf16.msra.mxu0 %v825
        %1407 = vmatpush.bf16.msra.mxu0 %v819
        %1408 = vmatmul.bf16.gmra.mxu0 %v354
        %v1409 = vpop.f32.mrf.mxu0
        %v1410 = vadd.f32 %v1361, %v1409
        %v1411 = vpop.f32.mrf.mxu0
        %v1412 = vadd.f32 %v1363, %v1411
        %1413 = vmatmul.bf16.gmra.mxu0 %v356
        %v1414 = vpop.f32.mrf.mxu0
        %v1415 = vadd.f32 %v1366, %v1414
        %v1416 = vpop.f32.mrf.mxu0
        %v1417 = vadd.f32 %v1368, %v1416
        %1418 = vmatmul.bf16.gmra.mxu0 %v358
        %v1419 = vpop.f32.mrf.mxu0
        %v1420 = vadd.f32 %v1371, %v1419
        %v1421 = vpop.f32.mrf.mxu0
        %v1422 = vadd.f32 %v1373, %v1421
        %1423 = vmatmul.bf16.gmra.mxu0 %v360
        %v1424 = vpop.f32.mrf.mxu0
        %v1425 = vadd.f32 %v1376, %v1424
        %v1426 = vpop.f32.mrf.mxu0
        %v1427 = vadd.f32 %v1378, %v1426
        %1428 = vmatmul.bf16.gmra.mxu0 %v362
        %v1429 = vpop.f32.mrf.mxu0
        %v1430 = vadd.f32 %v1381, %v1429
        %v1431 = vpop.f32.mrf.mxu0
        %v1432 = vadd.f32 %v1383, %v1431
        %1433 = vmatmul.bf16.gmra.mxu0 %v364
        %v1434 = vpop.f32.mrf.mxu0
        %v1435 = vadd.f32 %v1386, %v1434
        %v1436 = vpop.f32.mrf.mxu0
        %v1437 = vadd.f32 %v1388, %v1436
        %1438 = vmatmul.bf16.gmra.mxu0 %v366
        %v1439 = vpop.f32.mrf.mxu0
        %v1440 = vadd.f32 %v1391, %v1439
        %v1441 = vpop.f32.mrf.mxu0
        %v1442 = vadd.f32 %v1393, %v1441
        %1443 = vmatmul.bf16.gmra.mxu0 %v368
        %v1444 = vpop.f32.mrf.mxu0
        %v1445 = vadd.f32 %v1396, %v1444
        %v1446 = vpop.f32.mrf.mxu0
        %v1447 = vadd.f32 %v1398, %v1446
        %1448 = vdwg.mxu0
        %1449 = vmatpush.bf16.msra.mxu0 %v814
        %1450 = vmatpush.bf16.msra.mxu0 %v808
        %1451 = vmatpush.bf16.msra.mxu0 %v802
        %1452 = vmatpush.bf16.msra.mxu0 %v796
        %1453 = vmatpush.bf16.msra.mxu0 %v790
        %1454 = vmatpush.bf16.msra.mxu0 %v784
        %1455 = vmatpush.bf16.msra.mxu0 %v778
        %1456 = vmatpush.bf16.msra.mxu0 %v772
        %1457 = vmatmul.bf16.gmra.mxu0 %v353
        %v1458 = vpop.f32.mrf.mxu0
        %v1459 = vadd.f32 %v472, %v1458
        %v1460 = vpop.f32.mrf.mxu0
        %v1461 = vadd.f32 %v472, %v1460
        %1462 = vmatmul.bf16.gmra.mxu0 %v355
        %v1463 = vpop.f32.mrf.mxu0
        %v1464 = vadd.f32 %v472, %v1463
        %v1465 = vpop.f32.mrf.mxu0
        %v1466 = vadd.f32 %v472, %v1465
        %1467 = vmatmul.bf16.gmra.mxu0 %v357
        %v1468 = vpop.f32.mrf.mxu0
        %v1469 = vadd.f32 %v472, %v1468
        %v1470 = vpop.f32.mrf.mxu0
        %v1471 = vadd.f32 %v472, %v1470
        %1472 = vmatmul.bf16.gmra.mxu0 %v359
        %v1473 = vpop.f32.mrf.mxu0
        %v1474 = vadd.f32 %v472, %v1473
        %v1475 = vpop.f32.mrf.mxu0
        %v1476 = vadd.f32 %v472, %v1475
        %1477 = vmatmul.bf16.gmra.mxu0 %v361
        %v1478 = vpop.f32.mrf.mxu0
        %v1479 = vadd.f32 %v472, %v1478
        %v1480 = vpop.f32.mrf.mxu0
        %v1481 = vadd.f32 %v472, %v1480
        %1482 = vmatmul.bf16.gmra.mxu0 %v363
        %v1483 = vpop.f32.mrf.mxu0
        %v1484 = vadd.f32 %v472, %v1483
        %v1485 = vpop.f32.mrf.mxu0
        %v1486 = vadd.f32 %v472, %v1485
        %1487 = vmatmul.bf16.gmra.mxu0 %v365
        %v1488 = vpop.f32.mrf.mxu0
        %v1489 = vadd.f32 %v472, %v1488
        %v1490 = vpop.f32.mrf.mxu0
        %v1491 = vadd.f32 %v472, %v1490
        %1492 = vmatmul.bf16.gmra.mxu0 %v367
        %v1493 = vpop.f32.mrf.mxu0
        %v1494 = vadd.f32 %v472, %v1493
        %v1495 = vpop.f32.mrf.mxu0
        %v1496 = vadd.f32 %v472, %v1495
        %1497 = vdwg.mxu0
        %1498 = vmatpush.bf16.msra.mxu0 %v862
        %1499 = vmatpush.bf16.msra.mxu0 %v856
        %1500 = vmatpush.bf16.msra.mxu0 %v850
        %1501 = vmatpush.bf16.msra.mxu0 %v844
        %1502 = vmatpush.bf16.msra.mxu0 %v838
        %1503 = vmatpush.bf16.msra.mxu0 %v832
        %1504 = vmatpush.bf16.msra.mxu0 %v826
        %1505 = vmatpush.bf16.msra.mxu0 %v820
        %1506 = vmatmul.bf16.gmra.mxu0 %v354
        %v1507 = vpop.f32.mrf.mxu0
        %v1508 = vadd.f32 %v1459, %v1507
        %v1509 = vpop.f32.mrf.mxu0
        %v1510 = vadd.f32 %v1461, %v1509
        %1511 = vmatmul.bf16.gmra.mxu0 %v356
        %v1512 = vpop.f32.mrf.mxu0
        %v1513 = vadd.f32 %v1464, %v1512
        %v1514 = vpop.f32.mrf.mxu0
        %v1515 = vadd.f32 %v1466, %v1514
        %1516 = vmatmul.bf16.gmra.mxu0 %v358
        %v1517 = vpop.f32.mrf.mxu0
        %v1518 = vadd.f32 %v1469, %v1517
        %v1519 = vpop.f32.mrf.mxu0
        %v1520 = vadd.f32 %v1471, %v1519
        %1521 = vmatmul.bf16.gmra.mxu0 %v360
        %v1522 = vpop.f32.mrf.mxu0
        %v1523 = vadd.f32 %v1474, %v1522
        %v1524 = vpop.f32.mrf.mxu0
        %v1525 = vadd.f32 %v1476, %v1524
        %1526 = vmatmul.bf16.gmra.mxu0 %v362
        %v1527 = vpop.f32.mrf.mxu0
        %v1528 = vadd.f32 %v1479, %v1527
        %v1529 = vpop.f32.mrf.mxu0
        %v1530 = vadd.f32 %v1481, %v1529
        %1531 = vmatmul.bf16.gmra.mxu0 %v364
        %v1532 = vpop.f32.mrf.mxu0
        %v1533 = vadd.f32 %v1484, %v1532
        %v1534 = vpop.f32.mrf.mxu0
        %v1535 = vadd.f32 %v1486, %v1534
        %1536 = vmatmul.bf16.gmra.mxu0 %v366
        %v1537 = vpop.f32.mrf.mxu0
        %v1538 = vadd.f32 %v1489, %v1537
        %v1539 = vpop.f32.mrf.mxu0
        %v1540 = vadd.f32 %v1491, %v1539
        %1541 = vmatmul.bf16.gmra.mxu0 %v368
        %v1542 = vpop.f32.mrf.mxu0
        %v1543 = vadd.f32 %v1494, %v1542
        %v1544 = vpop.f32.mrf.mxu0
        %v1545 = vadd.f32 %v1496, %v1544
        %1546 = vdwg.mxu0
        %v1547 = vmul.f32 %v1018, 0.125
        %v1548 = vmul.f32 %v1116, 0.125
        %v1549 = vmul.f32 %v1020, 0.125
        %v1550 = vmul.f32 %v1118, 0.125
        %v1551 = vmul.f32 %v1023, 0.125
        %v1552 = vmul.f32 %v1121, 0.125
        %v1553 = vmul.f32 %v1025, 0.125
        %v1554 = vmul.f32 %v1123, 0.125
        %v1555 = vmul.f32 %v1028, 0.125
        %v1556 = vmul.f32 %v1126, 0.125
        %v1557 = vmul.f32 %v1030, 0.125
        %v1558 = vmul.f32 %v1128, 0.125
        %v1559 = vmul.f32 %v1033, 0.125
        %v1560 = vmul.f32 %v1131, 0.125
        %v1561 = vmul.f32 %v1035, 0.125
        %v1562 = vmul.f32 %v1133, 0.125
        %v1563 = vmul.f32 %v1038, 0.125
        %v1564 = vmul.f32 %v1136, 0.125
        %v1565 = vmul.f32 %v1040, 0.125
        %v1566 = vmul.f32 %v1138, 0.125
        %v1567 = vmul.f32 %v1043, 0.125
        %v1568 = vmul.f32 %v1141, 0.125
        %v1569 = vmul.f32 %v1045, 0.125
        %v1570 = vmul.f32 %v1143, 0.125
        %v1571 = vmul.f32 %v1048, 0.125
        %v1572 = vmul.f32 %v1146, 0.125
        %v1573 = vmul.f32 %v1050, 0.125
        %v1574 = vmul.f32 %v1148, 0.125
        %v1575 = vmul.f32 %v1053, 0.125
        %v1576 = vmul.f32 %v1151, 0.125
        %v1577 = vmul.f32 %v1055, 0.125
        %v1578 = vmul.f32 %v1153, 0.125
        %v1579 = vpack.c.bf16 %v1548, %v1547
        %v1580 = vpack.c.bf16 %v1550, %v1549
        %v1581 = vpack.c.bf16 %v1552, %v1551
        %v1582 = vpack.c.bf16 %v1554, %v1553
        %v1583 = vpack.c.bf16 %v1556, %v1555
        %v1584 = vpack.c.bf16 %v1558, %v1557
        %v1585 = vpack.c.bf16 %v1560, %v1559
        %v1586 = vpack.c.bf16 %v1562, %v1561
        %v1587 = vpack.c.bf16 %v1564, %v1563
        %v1588 = vpack.c.bf16 %v1566, %v1565
        %v1589 = vpack.c.bf16 %v1568, %v1567
        %v1590 = vpack.c.bf16 %v1570, %v1569
        %v1591 = vpack.c.bf16 %v1572, %v1571
        %v1592 = vpack.c.bf16 %v1574, %v1573
        %v1593 = vpack.c.bf16 %v1576, %v1575
        %v1594 = vpack.c.bf16 %v1578, %v1577
        %1595 = vst [vmem:[%s302] sm:$0xff] %v1579
        %1596 = vst [vmem:[%s302 + $0x8] sm:$0xff] %v1580
        %1597 = vst [vmem:[%s302 + $0x10] sm:$0xff] %v1581
        %1598 = vst [vmem:[%s302 + $0x18] sm:$0xff] %v1582
        %1599 = vst [vmem:[%s302 + $0x20] sm:$0xff] %v1583
        %1600 = vst [vmem:[%s302 + $0x28] sm:$0xff] %v1584
        %1601 = vst [vmem:[%s302 + $0x30] sm:$0xff] %v1585
        %1602 = vst [vmem:[%s302 + $0x38] sm:$0xff] %v1586
        %1603 = vst [vmem:[%s302 + $0x40] sm:$0xff] %v1587
        %1604 = vst [vmem:[%s302 + $0x48] sm:$0xff] %v1588
        %1605 = vst [vmem:[%s302 + $0x50] sm:$0xff] %v1589
        %1606 = vst [vmem:[%s302 + $0x58] sm:$0xff] %v1590
        %1607 = vst [vmem:[%s302 + $0x60] sm:$0xff] %v1591
        %1608 = vst [vmem:[%s302 + $0x68] sm:$0xff] %v1592
        %1609 = vst [vmem:[%s302 + $0x70] sm:$0xff] %v1593
        %1610 = vst [vmem:[%s302 + $0x78] sm:$0xff] %v1594
        %v1611 = vpack.c.bf16 %v1312, %v1214
        %v1612 = vpack.c.bf16 %v1314, %v1216
        %v1613 = vpack.c.bf16 %v1317, %v1219
        %v1614 = vpack.c.bf16 %v1319, %v1221
        %v1615 = vpack.c.bf16 %v1322, %v1224
        %v1616 = vpack.c.bf16 %v1324, %v1226
        %v1617 = vpack.c.bf16 %v1327, %v1229
        %v1618 = vpack.c.bf16 %v1329, %v1231
        %v1619 = vpack.c.bf16 %v1332, %v1234
        %v1620 = vpack.c.bf16 %v1334, %v1236
        %v1621 = vpack.c.bf16 %v1337, %v1239
        %v1622 = vpack.c.bf16 %v1339, %v1241
        %v1623 = vpack.c.bf16 %v1342, %v1244
        %v1624 = vpack.c.bf16 %v1344, %v1246
        %v1625 = vpack.c.bf16 %v1347, %v1249
        %v1626 = vpack.c.bf16 %v1349, %v1251
        %1627 = vst [vmem:[%s309] sm:$0xff] %v1611
        %1628 = vst [vmem:[%s309 + $0x8] sm:$0xff] %v1612
        %1629 = vst [vmem:[%s309 + $0x10] sm:$0xff] %v1613
        %1630 = vst [vmem:[%s309 + $0x18] sm:$0xff] %v1614
        %1631 = vst [vmem:[%s309 + $0x20] sm:$0xff] %v1615
        %1632 = vst [vmem:[%s309 + $0x28] sm:$0xff] %v1616
        %1633 = vst [vmem:[%s309 + $0x30] sm:$0xff] %v1617
        %1634 = vst [vmem:[%s309 + $0x38] sm:$0xff] %v1618
        %1635 = vst [vmem:[%s309 + $0x40] sm:$0xff] %v1619
        %1636 = vst [vmem:[%s309 + $0x48] sm:$0xff] %v1620
        %1637 = vst [vmem:[%s309 + $0x50] sm:$0xff] %v1621
        %1638 = vst [vmem:[%s309 + $0x58] sm:$0xff] %v1622
        %1639 = vst [vmem:[%s309 + $0x60] sm:$0xff] %v1623
        %1640 = vst [vmem:[%s309 + $0x68] sm:$0xff] %v1624
        %1641 = vst [vmem:[%s309 + $0x70] sm:$0xff] %v1625
        %1642 = vst [vmem:[%s309 + $0x78] sm:$0xff] %v1626
        %v1643 = vpack.c.bf16 %v1508, %v1410
        %v1644 = vpack.c.bf16 %v1510, %v1412
        %v1645 = vpack.c.bf16 %v1513, %v1415
        %v1646 = vpack.c.bf16 %v1515, %v1417
        %v1647 = vpack.c.bf16 %v1518, %v1420
        %v1648 = vpack.c.bf16 %v1520, %v1422
        %v1649 = vpack.c.bf16 %v1523, %v1425
        %v1650 = vpack.c.bf16 %v1525, %v1427
        %v1651 = vpack.c.bf16 %v1528, %v1430
        %v1652 = vpack.c.bf16 %v1530, %v1432
        %v1653 = vpack.c.bf16 %v1533, %v1435
        %v1654 = vpack.c.bf16 %v1535, %v1437
        %v1655 = vpack.c.bf16 %v1538, %v1440
        %v1656 = vpack.c.bf16 %v1540, %v1442
        %v1657 = vpack.c.bf16 %v1543, %v1445
        %v1658 = vpack.c.bf16 %v1545, %v1447
        %1659 = vst [vmem:[%s316] sm:$0xff] %v1643
        %1660 = vst [vmem:[%s316 + $0x8] sm:$0xff] %v1644
        %1661 = vst [vmem:[%s316 + $0x10] sm:$0xff] %v1645
        %1662 = vst [vmem:[%s316 + $0x18] sm:$0xff] %v1646
        %1663 = vst [vmem:[%s316 + $0x20] sm:$0xff] %v1647
        %1664 = vst [vmem:[%s316 + $0x28] sm:$0xff] %v1648
        %1665 = vst [vmem:[%s316 + $0x30] sm:$0xff] %v1649
        %1666 = vst [vmem:[%s316 + $0x38] sm:$0xff] %v1650
        %1667 = vst [vmem:[%s316 + $0x40] sm:$0xff] %v1651
        %1668 = vst [vmem:[%s316 + $0x48] sm:$0xff] %v1652
        %1669 = vst [vmem:[%s316 + $0x50] sm:$0xff] %v1653
        %1670 = vst [vmem:[%s316 + $0x58] sm:$0xff] %v1654
        %1671 = vst [vmem:[%s316 + $0x60] sm:$0xff] %v1655
        %1672 = vst [vmem:[%s316 + $0x68] sm:$0xff] %v1656
        %1673 = vst [vmem:[%s316 + $0x70] sm:$0xff] %v1657
        %1674 = vst [vmem:[%s316 + $0x78] sm:$0xff] %v1658
        %s1675 = sand.u32 %s119, 1
        %s1676 = scalar_lea.sflag [#allocation4], %s1675
        %s1677 = sand.u32 %s119, 1
        %s1678 = smul.addr %s1677, 128
        %s1679 = scalar_lea.vmem [#allocation8], %s1678
        %s1680 = sand.u32 %s27, 1
        %s1681 = scalar_lea.sflag [#allocation10], %s1680
        %s1682 = sand.u32 %s147, 1
        %s1683 = smul.addr %s1682, 128
        %s1684 = scalar_lea.vmem [#allocation9], %s1683
        %s1685 = sand.u32 %s27, 1
        %s1686 = scalar_lea.sflag [#allocation10], %s1685
        %s1687 = sand.u32 %s175, 1
        %s1688 = smul.addr %s1687, 128
        %s1689 = scalar_lea.vmem [#allocation11], %s1688
        // Predicated region
        $region45: #{tpu_custom_call.1} parent=31 // pred_check
          %p1690 = pneg %p129
        $region46: #{tpu_custom_call.1} parent=31 // pred_check_branch
          %1692 = sbr.rel (%p1690) target = $region48
        $region47: #{tpu_custom_call.1} parent=31 // pred_region
          %s1693 = smul.u32 16, %s32
          %1695 = vsyncadd %s1676, 0
          %s1696 = smul.addr %s1693, 2
          %s1697 = smul.addr %s31, 64
          %s1698 = sadd.s32 %s1696, %s1697
          %s1699 = smul.addr %s1698, 4
          %s1700 = scalar_lea.hbm %s3, %s1699
          %s1701 = sshll.u32 %s1679, 4
          %s1702 = int_to_ptr.vmem [resolvable:$true] %s1701
          %s1703 = sshll.u32 %s1700, 4
          %s1704 = int_to_ptr.hbm [resolvable:$true] %s1703
          %1709 = dma.vmem_to_hbm [thread:$0]  %s1702, 2048, %s1704, %s1676, 128, 128, 8
        $region48: #{tpu_custom_call.1} parent=31 // pred_fallthru
          _
        // Predicated region
        $region49: #{tpu_custom_call.1} parent=31 // pred_check
          %p1710 = pneg %p157
        $region50: #{tpu_custom_call.1} parent=31 // pred_check_branch
          %1712 = sbr.rel (%p1710) target = $region52
        $region51: #{tpu_custom_call.1} parent=31 // pred_region
          %s1713 = smul.u32 16, %s32
          %1715 = vsyncadd %s1681, 0
          %s1716 = smul.addr %s1713, 2
          %s1717 = smul.addr %s31, 64
          %s1718 = sadd.s32 %s1716, %s1717
          %s1719 = smul.addr %s1718, 4
          %s1720 = scalar_lea.hbm %s4, %s1719
          %s1721 = sshll.u32 %s1684, 4
          %s1722 = int_to_ptr.vmem [resolvable:$true] %s1721
          %s1723 = sshll.u32 %s1720, 4
          %s1724 = int_to_ptr.hbm [resolvable:$true] %s1723
          %1729 = dma.vmem_to_hbm [thread:$0]  %s1722, 2048, %s1724, %s1681, 128, 128, 8
        $region52: #{tpu_custom_call.1} parent=31 // pred_fallthru
          _
        // Predicated region
        $region53: #{tpu_custom_call.1} parent=31 // pred_check
          %p1730 = pneg %p185
        $region54: #{tpu_custom_call.1} parent=31 // pred_check_branch
          %1732 = sbr.rel (%p1730) target = $region56
        $region55: #{tpu_custom_call.1} parent=31 // pred_region
          %s1733 = smul.u32 16, %s32
          %1735 = vsyncadd %s1686, 0
          %s1736 = smul.addr %s1733, 2
          %s1737 = smul.addr %s31, 64
          %s1738 = sadd.s32 %s1736, %s1737
          %s1739 = smul.addr %s1738, 4
          %s1740 = scalar_lea.hbm %s5, %s1739
          %s1741 = sshll.u32 %s1689, 4
          %s1742 = int_to_ptr.vmem [resolvable:$true] %s1741
          %s1743 = sshll.u32 %s1740, 4
          %s1744 = int_to_ptr.hbm [resolvable:$true] %s1743
          %1749 = dma.vmem_to_hbm [thread:$0]  %s1742, 2048, %s1744, %s1686, 128, 128, 8
        $region56: #{tpu_custom_call.1} parent=31 // pred_fallthru
          _
      $region32: #{tpu_custom_call.1} parent=5 // pred_fallthru
        _
      %p1750 = scmp.le.s32.totalorder 2, %s22
      // Predicated region
      $region57: #{tpu_custom_call.1} parent=5 // pred_check
        %p1751 = pneg %p1750
      $region58: #{tpu_custom_call.1} parent=5 // pred_check_branch
        %1753 = sbr.rel (%p1751) target = $region60
      $region59: #{tpu_custom_call.1} parent=5 // pred_region
        %s1754 = ssub.s32 %s22, 2
        // Predicated region
        $region61: #{tpu_custom_call.1} parent=59 // pred_check
          %p1755 = pneg %p135
        $region62: #{tpu_custom_call.1} parent=59 // pred_check_branch
          %1757 = sbr.rel (%p1755) target = $region64
        $region63: #{tpu_custom_call.1} parent=59 // pred_region
          %s1758 = sand.u32 %s120, 1
          %s1759 = scalar_lea.sflag [#allocation4], %s1758
          %s1760 = sand.u32 %s120, 1
          %s1761 = smul.addr %s1760, 128
          %s1762 = scalar_lea.vmem [#allocation8], %s1761
          %1764 = dma.done %s1759, 2048
        $region64: #{tpu_custom_call.1} parent=59 // pred_fallthru
          _
        // Predicated region
        $region65: #{tpu_custom_call.1} parent=59 // pred_check
          %p1765 = pneg %p163
        $region66: #{tpu_custom_call.1} parent=59 // pred_check_branch
          %1767 = sbr.rel (%p1765) target = $region68
        $region67: #{tpu_custom_call.1} parent=59 // pred_region
          %s1768 = sand.u32 %s28, 1
          %s1769 = scalar_lea.sflag [#allocation10], %s1768
          %s1770 = sand.u32 %s148, 1
          %s1771 = smul.addr %s1770, 128
          %s1772 = scalar_lea.vmem [#allocation9], %s1771
          %1774 = dma.done %s1769, 2048
        $region68: #{tpu_custom_call.1} parent=59 // pred_fallthru
          _
        // Predicated region
        $region69: #{tpu_custom_call.1} parent=59 // pred_check
          %p1775 = pneg %p191
        $region70: #{tpu_custom_call.1} parent=59 // pred_check_branch
          %1777 = sbr.rel (%p1775) target = $region72
        $region71: #{tpu_custom_call.1} parent=59 // pred_region
          %s1778 = sand.u32 %s28, 1
          %s1779 = scalar_lea.sflag [#allocation10], %s1778
          %s1780 = sand.u32 %s176, 1
          %s1781 = smul.addr %s1780, 128
          %s1782 = scalar_lea.vmem [#allocation11], %s1781
          %1784 = dma.done %s1779, 2048
        $region72: #{tpu_custom_call.1} parent=59 // pred_fallthru
          _
      $region60: #{tpu_custom_call.1} parent=5 // pred_fallthru
        _
    $region6: #{tpu_custom_call.1} parent=1 // loop_footer
      %s26 = sadd.s32 1, %s22
    $region7: #{tpu_custom_call.1} parent=1 // loop_footer_branch
      %21 = sbr.rel target = $region3
    $region8: #{tpu_custom_call.1} parent=1 // loop_exit
      _
    %1785 = vsyncpa [#allocation3], 1
    %s1786 = scalar_lea.sflag [#allocation3], 1
    %1787 = vsyncpa %s1786, 1
    %1788 = vsyncpa [#allocation6], 1
    %1789 = vsyncpa [#allocation4], 1
    %s1790 = scalar_lea.sflag [#allocation4], 1
    %1791 = vsyncpa %s1790, 1
    %1792 = vsyncpa [#allocation10], 1
    %s1793 = scalar_lea.sflag [#allocation10], 1
    %1794 = vsyncpa %s1793, 1

</llo_original>
